<compile_context>
chip_gen: v6e
topology: v6e:2x2x1
jax: 0.10.0
libtpu: 0.0.40
codegen_flags: <defaults>
</compile_context>

<pallas_src>
import functools

import jax
import jax.numpy as jnp
from jax.experimental import pallas as pl
from jax.experimental.pallas import tpu as pltpu


def _self_distill_kernel(inv_temp_ref,                       # SMEM (1,) 1/teacher_temp
                         student_ref, teacher_ref, center_ref,   # VMEM tiles
                         loss_part_ref, center_part_ref,         # per-core partial outputs
                         *, inv_student_temp, block_rows, blocks_per_core,
                         batch_size, needs_mask):
    core = pl.program_id(0)    # "parallel" axis (one block of outputs per core)
    step = pl.program_id(1)    # "arbitrary" reduction axis over batch tiles

    @pl.when(step == 0)
    def _init():
        loss_part_ref[...] = jnp.zeros_like(loss_part_ref)
        center_part_ref[...] = jnp.zeros_like(center_part_ref)

    inv_tt = inv_temp_ref[0]                                  # scalar (SMEM)

    teacher = teacher_ref[...].astype(jnp.float32)            # (TB, D)
    center = center_ref[...].astype(jnp.float32)              # (1, D)

    # ---- teacher softmax pieces (softmax never materialized) ----
    t_logits = (teacher - center) * inv_tt
    t_max = jnp.max(t_logits, axis=-1, keepdims=True)
    t_exp = jnp.exp(t_logits - t_max)
    t_sum = jnp.sum(t_exp, axis=-1, keepdims=True)            # (TB, 1)

    # ---- student log-softmax pieces (log-probs never materialized) ----
    s = student_ref[...].astype(jnp.float32) * inv_student_temp
    s_max = jnp.max(s, axis=-1, keepdims=True)
    s_shift = s - s_max
    s_lse = jnp.log(jnp.sum(jnp.exp(s_shift), axis=-1, keepdims=True))   # (TB, 1)

    # ---- fused CE: sum(-softmax(t) * log_softmax(s)) = s_lse - sum(t_exp*s_shift)/t_sum ----
    cross = jnp.sum(t_exp * s_shift, axis=-1, keepdims=True)  # (TB, 1)
    per_row = s_lse - cross * pl.reciprocal(t_sum, approx=False)  # (TB, 1)

    if needs_mask:
        # Ragged / over-provisioned tiles: zero out rows whose global index >= batch_size.
        logical_block = core * blocks_per_core + step
        row0 = logical_block * block_rows
        rows = jax.lax.broadcasted_iota(jnp.int32, (block_rows, 1), 0) + row0
        valid = rows < batch_size
        per_row = jnp.where(valid, per_row, 0.0)
        teacher = jnp.where(valid, teacher, 0.0)

    # ---- accumulate directly into the (VMEM-resident) per-core output blocks ----
    loss_part_ref[...] = loss_part_ref[...] + jnp.sum(per_row)
    center_part_ref[...] = (center_part_ref[...]
                            + jnp.sum(teacher, axis=0, keepdims=True)[None])


def _pick_block_rows(batch, target=256):
    """Row tile: full batch if small, else `target` (multiple of 8); ragged tail is masked."""
    if batch <= target:
        return batch
    return target


def self_distillation_forward(student_output, teacher_output, center, teacher_temp,
                              *, student_temp=0.1, center_momentum=0.9,
                              block_rows=None, num_core_splits=2):
    """Returns (total_loss scalar, updated center [1, D])."""
    B, D = student_output.shape
    assert teacher_output.shape == (B, D)
    assert center.shape == (1, D)

    if block_rows is None:
        block_rows = _pick_block_rows(B)
    block_rows = min(block_rows, B)
    if block_rows != B and block_rows % 8 != 0:
        raise ValueError(f"block_rows ({block_rows}) must be a multiple of 8 or equal to B ({B})")

    num_blocks = pl.cdiv(B, block_rows)
    num_cores = max(1, min(num_core_splits, num_blocks))
    blocks_per_core = pl.cdiv(num_blocks, num_cores)
    needs_mask = (num_cores * blocks_per_core * block_rows) != B
    last_block = num_blocks - 1

    # Host-side reciprocal of the scheduled teacher temperature (prefetch scalar -> SMEM).
    inv_temp = (1.0 / jnp.asarray(teacher_temp, dtype=jnp.float32)).reshape((1,))

    kernel = functools.partial(
        _self_distill_kernel,
        inv_student_temp=float(1.0 / student_temp),
        block_rows=block_rows,
        blocks_per_core=blocks_per_core,
        batch_size=B,
        needs_mask=needs_mask,
    )

    def batch_map(c, i, inv_temp_ref):
        # Clamp so over-provisioned logical tiles (fully masked anyway) never DMA out of bounds.
        b = c * blocks_per_core + i
        return (jnp.minimum(b, last_block), 0)

    # Scoped-VMEM limit sized from the actual double-buffer footprint (2 inputs x 2 buffers),
    # with headroom; capped at 64 MiB so it is always <= physical VMEM (v7x smallest).
    in_itemsize = jnp.dtype(student_output.dtype).itemsize
    tile_bytes = block_rows * D * in_itemsize
    vmem_limit = int(min(max(4 * tile_bytes + (16 << 20), 32 << 20), 64 << 20))

    grid_spec = pltpu.PrefetchScalarGridSpec(
        num_scalar_prefetch=1,                        # 1/teacher_temp -> SMEM
        grid=(num_cores, blocks_per_core),
        in_specs=[
            pl.BlockSpec((block_rows, D), batch_map),               # student tile
            pl.BlockSpec((block_rows, D), batch_map),               # teacher tile
            pl.BlockSpec((1, D), lambda c, i, it: (0, 0)),          # center (resident)
        ],
        out_specs=(
            pl.BlockSpec((1, 1, 1), lambda c, i, it: (c, 0, 0)),    # per-core loss partial
            pl.BlockSpec((1, 1, D), lambda c, i, it: (c, 0, 0)),    # per-core teacher-sum partial
        ),
    )

    loss_part, center_part = pl.pallas_call(
        kernel,
        out_shape=(
            jax.ShapeDtypeStruct((num_cores, 1, 1), jnp.float32),
            jax.ShapeDtypeStruct((num_cores, 1, D), jnp.float32),
        ),
        grid_spec=grid_spec,
        compiler_params=pltpu.CompilerParams(
            dimension_semantics=("parallel", "arbitrary"),
            vmem_limit_bytes=vmem_limit),
    )(inv_temp, student_output, teacher_output, center)

    # Tiny follow-up combine: mean over the batch + center EMA (touches ~2*D floats).
    inv_b = 1.0 / B
    loss = jnp.sum(loss_part) * inv_b
    batch_center = jnp.sum(center_part, axis=0) * inv_b                 # (1, D)
    new_center = (center.astype(jnp.float32) * center_momentum
                  + batch_center * (1.0 - center_momentum))
    return loss, new_center


def _teacher_temp_schedule(warmup_teacher_temp, teacher_temp,
                           warmup_teacher_temp_epochs, nepochs):
    warm = jnp.linspace(warmup_teacher_temp, teacher_temp, warmup_teacher_temp_epochs)
    rest = jnp.ones((nepochs - warmup_teacher_temp_epochs,)) * teacher_temp
    return jnp.concatenate([warm, rest]).astype(jnp.float32)


def _reference(student_output, teacher_output, center, teacher_temp,
               student_temp=0.1, center_momentum=0.9):
    s = student_output.astype(jnp.float32) / student_temp
    t = jax.nn.softmax((teacher_output.astype(jnp.float32) - center) / teacher_temp, axis=-1)
    loss = jnp.sum(-t * jax.nn.log_softmax(s, axis=-1), axis=-1).mean()
    bc = (jnp.sum(teacher_output.astype(jnp.float32), axis=0, keepdims=True)
          / teacher_output.shape[0])
    new_center = center * center_momentum + bc * (1.0 - center_momentum)
    return loss, new_center


if __name__ == "__main__":
    # Module config (small, but consistent with the module: D = out_dim + 4096).
    out_dim = 128
    D = out_dim + 4096          # 4224, multiple of 128
    B = 20                      # deliberately NOT a multiple of 8 -> exercises the masked tail
    warmup_teacher_temp = 0.04
    teacher_temp = 0.07
    warmup_teacher_temp_epochs = 3
    nepochs = 10
    epoch = 1

    key = jax.random.PRNGKey(0)
    k1, k2 = jax.random.split(key)
    student_output = jax.random.normal(k1, (B, D), dtype=jnp.float32)
    teacher_output = jax.random.normal(k2, (B, D), dtype=jnp.float32)
    center = jnp.zeros((1, D), dtype=jnp.float32)   # register_buffer('center', zeros)

    schedule = _teacher_temp_schedule(warmup_teacher_temp, teacher_temp,
                                      warmup_teacher_temp_epochs, nepochs)
    temp_e = float(schedule[epoch])

    # block_rows=8 -> 3 batch blocks split over a 2-wide "parallel" axis, exercising the
    # init/accumulate path, the clamped index_map, and the row mask.
    loss, new_center = self_distillation_forward(
        student_output, teacher_output, center, temp_e,
        student_temp=0.1, center_momentum=0.9, block_rows=8)
    loss = jax.block_until_ready(loss)
    new_center = jax.block_until_ready(new_center)

    ref_loss, ref_center = _reference(student_output, teacher_output, center, temp_e)
    assert jnp.allclose(loss, ref_loss, rtol=1e-4, atol=1e-5), (loss, ref_loss)
    assert jnp.allclose(new_center, ref_center, rtol=1e-5, atol=1e-5)

    # bf16-input path (half the HBM read traffic; kernel upcasts in-register).
    s_bf = student_output.astype(jnp.bfloat16)
    t_bf = teacher_output.astype(jnp.bfloat16)
    loss_bf, center_bf = self_distillation_forward(
        s_bf, t_bf, center, temp_e, student_temp=0.1, center_momentum=0.9, block_rows=8)
    loss_bf = jax.block_until_ready(loss_bf)
    ref_loss_bf, ref_center_bf = _reference(s_bf, t_bf, center, temp_e)
    assert jnp.allclose(loss_bf, ref_loss_bf, rtol=1e-3, atol=1e-4), (loss_bf, ref_loss_bf)
    assert jnp.allclose(center_bf, ref_center_bf, rtol=1e-3, atol=1e-4)

    print("KERNEL_OK")
</pallas_src>

<mosaic_0001>
module attributes {stable_mosaic.version = 11 : i64} {
  func.func @_self_distill_kernel(%arg0: i32, %arg1: i32, %arg2: memref<1xf32, #tpu.memory_space<smem>>, %arg3: memref<8x4224xf32, #tpu.memory_space<vmem>>, %arg4: memref<8x4224xf32, #tpu.memory_space<vmem>>, %arg5: memref<1x4224xf32, #tpu.memory_space<vmem>>, %arg6: memref<1x1x1xf32, #tpu.memory_space<vmem>>, %arg7: memref<1x1x4224xf32, #tpu.memory_space<vmem>>) attributes {dimension_semantics = [#tpu.dimension_semantics<parallel>, #tpu.dimension_semantics<arbitrary>], iteration_bounds = array<i64: 2, 2>, scalar_prefetch = 1 : i64, scratch_operands = 0 : i64, tpu.core_type = #tpu.core_type<tc>, window_params = [{transform_indices = @transform_0, window_bounds = array<i64: 8, 4224>}, {transform_indices = @transform_1, window_bounds = array<i64: 8, 4224>}, {pipeline_mode = #tpu.pipeline_mode<synchronous>, transform_indices = @transform_2, window_bounds = array<i64: 1, 4224>}, {transform_indices = @transform_3, window_bounds = array<i64: 1, 1, 1>}, {transform_indices = @transform_4, window_bounds = array<i64: 1, 1, 4224>}]} {
    %c0_i32 = arith.constant 0 : i32
    %0 = arith.cmpi eq, %arg1, %c0_i32 : i32
    %1 = arith.extui %0 : i1 to i32
    %c0_i32_0 = arith.constant 0 : i32
    %2 = arith.cmpi ne, %1, %c0_i32_0 : i32
    scf.if %2 {
      %cst_28 = arith.constant 0.000000e+00 : f32
      %62 = vector.broadcast %cst_28 : f32 to vector<1x1x1xf32>
      %c0_29 = arith.constant 0 : index
      %c0_30 = arith.constant 0 : index
      %c0_31 = arith.constant 0 : index
      %63 = vector.load %arg6[%c0_29, %c0_30, %c0_31] : memref<1x1x1xf32, #tpu.memory_space<vmem>>, vector<1x1x1xf32>
      tpu.vector_store %arg6[%c0_29, %c0_30, %c0_31], %62 {strides = array<i32>} : memref<1x1x1xf32, #tpu.memory_space<vmem>>, vector<1x1x1xf32>,
      %cst_32 = arith.constant 0.000000e+00 : f32
      %64 = vector.broadcast %cst_32 : f32 to vector<1x1x4224xf32>
      %c0_33 = arith.constant 0 : index
      %c0_34 = arith.constant 0 : index
      %c0_35 = arith.constant 0 : index
      %65 = vector.load %arg7[%c0_33, %c0_34, %c0_35] : memref<1x1x4224xf32, #tpu.memory_space<vmem>>, vector<1x1x4224xf32>
      tpu.vector_store %arg7[%c0_33, %c0_34, %c0_35], %64 {strides = array<i32>} : memref<1x1x4224xf32, #tpu.memory_space<vmem>>, vector<1x1x4224xf32>,
    } else {
    }
    %c0 = arith.constant 0 : index
    %3 = memref.load %arg2[%c0] : memref<1xf32, #tpu.memory_space<smem>>
    %c0_1 = arith.constant 0 : index
    %c0_2 = arith.constant 0 : index
    %4 = vector.load %arg4[%c0_1, %c0_2] : memref<8x4224xf32, #tpu.memory_space<vmem>>, vector<8x4224xf32>
    %c0_3 = arith.constant 0 : index
    %c0_4 = arith.constant 0 : index
    %5 = vector.load %arg5[%c0_3, %c0_4] : memref<1x4224xf32, #tpu.memory_space<vmem>>, vector<1x4224xf32>
    %6 = vector.broadcast %5 : vector<1x4224xf32> to vector<8x4224xf32>
    %7 = arith.subf %4, %6 : vector<8x4224xf32>
    %8 = vector.broadcast %3 : f32 to vector<8x4224xf32>
    %9 = arith.mulf %7, %8 : vector<8x4224xf32>
    %cst = arith.constant dense<0xFF800000> : vector<8xf32>
    %10 = vector.multi_reduction <maximumf>, %9, %cst [1] : vector<8x4224xf32> to vector<8xf32>
    %11 = vector.shape_cast %10 : vector<8xf32> to vector<8x1xf32>
    %12 = vector.broadcast %11 : vector<8x1xf32> to vector<8x4224xf32>
    %13 = arith.subf %9, %12 : vector<8x4224xf32>
    %14 = math.exp %13 : vector<8x4224xf32>
    %cst_5 = arith.constant dense<0.000000e+00> : vector<8xf32>
    %15 = vector.multi_reduction <add>, %14, %cst_5 [1] : vector<8x4224xf32> to vector<8xf32>
    %16 = vector.shape_cast %15 : vector<8xf32> to vector<8x1xf32>
    %c0_6 = arith.constant 0 : index
    %c0_7 = arith.constant 0 : index
    %17 = vector.load %arg3[%c0_6, %c0_7] : memref<8x4224xf32, #tpu.memory_space<vmem>>, vector<8x4224xf32>
    %cst_8 = arith.constant 1.000000e+01 : f32
    %18 = vector.broadcast %cst_8 : f32 to vector<8x4224xf32>
    %19 = arith.mulf %17, %18 : vector<8x4224xf32>
    %cst_9 = arith.constant dense<0xFF800000> : vector<8xf32>
    %20 = vector.multi_reduction <maximumf>, %19, %cst_9 [1] : vector<8x4224xf32> to vector<8xf32>
    %21 = vector.shape_cast %20 : vector<8xf32> to vector<8x1xf32>
    %22 = vector.broadcast %21 : vector<8x1xf32> to vector<8x4224xf32>
    %23 = arith.subf %19, %22 : vector<8x4224xf32>
    %24 = math.exp %23 : vector<8x4224xf32>
    %cst_10 = arith.constant dense<0.000000e+00> : vector<8xf32>
    %25 = vector.multi_reduction <add>, %24, %cst_10 [1] : vector<8x4224xf32> to vector<8xf32>
    %26 = vector.shape_cast %25 : vector<8xf32> to vector<8x1xf32>
    %27 = math.log %26 : vector<8x1xf32>
    %28 = arith.mulf %14, %23 : vector<8x4224xf32>
    %cst_11 = arith.constant dense<0.000000e+00> : vector<8xf32>
    %29 = vector.multi_reduction <add>, %28, %cst_11 [1] : vector<8x4224xf32> to vector<8xf32>
    %30 = vector.shape_cast %29 : vector<8xf32> to vector<8x1xf32>
    %31 = tpu.reciprocal %16 : vector<8x1xf32> -> vector<8x1xf32>
    %32 = arith.mulf %30, %31 : vector<8x1xf32>
    %33 = arith.subf %27, %32 : vector<8x1xf32>
    %c2_i32 = arith.constant 2 : i32
    %34 = arith.muli %arg0, %c2_i32 : i32
    %35 = arith.addi %34, %arg1 : i32
    %c8_i32 = arith.constant 8 : i32
    %36 = arith.muli %35, %c8_i32 : i32
    %37 = tpu.iota {dimensions = array<i32: 0>} : vector<8x1xi32>
    %38 = vector.broadcast %36 : i32 to vector<8x1xi32>
    %39 = arith.addi %37, %38 : vector<8x1xi32>
    %c20_i32 = arith.constant 20 : i32
    %40 = vector.broadcast %c20_i32 : i32 to vector<8x1xi32>
    %41 = arith.cmpi slt, %39, %40 : vector<8x1xi32>
    %cst_12 = arith.constant 0.000000e+00 : f32
    %42 = vector.broadcast %cst_12 : f32 to vector<8x1xf32>
    %43 = arith.select %41, %33, %42 : vector<8x1xi1>, vector<8x1xf32>
    %cst_13 = arith.constant 0.000000e+00 : f32
    %44 = vector.shape_cast %41 : vector<8x1xi1> to vector<8x1xi1>
    %45 = vector.broadcast %44 : vector<8x1xi1> to vector<8x4224xi1>
    %46 = vector.broadcast %cst_13 : f32 to vector<8x4224xf32>
    %47 = arith.select %45, %4, %46 : vector<8x4224xi1>, vector<8x4224xf32>
    %c0_14 = arith.constant 0 : index
    %c0_15 = arith.constant 0 : index
    %c0_16 = arith.constant 0 : index
    %48 = vector.load %arg6[%c0_14, %c0_15, %c0_16] : memref<1x1x1xf32, #tpu.memory_space<vmem>>, vector<1x1x1xf32>
    %49 = vector.shape_cast %43 : vector<8x1xf32> to vector<1x8x1xf32>
    %cst_17 = arith.constant dense<0.000000e+00> : vector<1xf32>
    %50 = vector.multi_reduction <add>, %49, %cst_17 [1, 2] : vector<1x8x1xf32> to vector<1xf32>
    %51 = vector.shape_cast %50 : vector<1xf32> to vector<1x1x1xf32>
    %52 = vector.extract %51[0, 0, 0] : f32 from vector<1x1x1xf32>
    %53 = vector.broadcast %52 : f32 to vector<1x1x1xf32>
    %54 = arith.addf %48, %53 : vector<1x1x1xf32>
    %c0_18 = arith.constant 0 : index
    %c0_19 = arith.constant 0 : index
    %c0_20 = arith.constant 0 : index
    %55 = vector.load %arg6[%c0_18, %c0_19, %c0_20] : memref<1x1x1xf32, #tpu.memory_space<vmem>>, vector<1x1x1xf32>
    tpu.vector_store %arg6[%c0_18, %c0_19, %c0_20], %54 {strides = array<i32>} : memref<1x1x1xf32, #tpu.memory_space<vmem>>, vector<1x1x1xf32>,
    %c0_21 = arith.constant 0 : index
    %c0_22 = arith.constant 0 : index
    %c0_23 = arith.constant 0 : index
    %56 = vector.load %arg7[%c0_21, %c0_22, %c0_23] : memref<1x1x4224xf32, #tpu.memory_space<vmem>>, vector<1x1x4224xf32>
    %cst_24 = arith.constant dense<0.000000e+00> : vector<4224xf32>
    %57 = vector.multi_reduction <add>, %47, %cst_24 [0] : vector<8x4224xf32> to vector<4224xf32>
    %58 = vector.shape_cast %57 : vector<4224xf32> to vector<1x4224xf32>
    %59 = vector.shape_cast %58 : vector<1x4224xf32> to vector<1x1x4224xf32>
    %60 = arith.addf %56, %59 : vector<1x1x4224xf32>
    %c0_25 = arith.constant 0 : index
    %c0_26 = arith.constant 0 : index
    %c0_27 = arith.constant 0 : index
    %61 = vector.load %arg7[%c0_25, %c0_26, %c0_27] : memref<1x1x4224xf32, #tpu.memory_space<vmem>>, vector<1x1x4224xf32>
    tpu.vector_store %arg7[%c0_25, %c0_26, %c0_27], %60 {strides = array<i32>} : memref<1x1x4224xf32, #tpu.memory_space<vmem>>, vector<1x1x4224xf32>,
    return
  }
  func.func @transform_0(%arg0: i32, %arg1: i32, %arg2: memref<1xf32, #tpu.memory_space<smem>>) -> (i32, i32) {
    %c2_i32 = arith.constant 2 : i32
    %0 = arith.muli %arg0, %c2_i32 : i32
    %1 = arith.addi %0, %arg1 : i32
    %c2_i32_0 = arith.constant 2 : i32
    %2 = arith.minsi %1, %c2_i32_0 : i32
    %c0_i32 = arith.constant 0 : i32
    %c0_i32_1 = arith.constant 0 : i32
    return %2, %c0_i32 : i32, i32
  }
  func.func @transform_1(%arg0: i32, %arg1: i32, %arg2: memref<1xf32, #tpu.memory_space<smem>>) -> (i32, i32) {
    %c2_i32 = arith.constant 2 : i32
    %0 = arith.muli %arg0, %c2_i32 : i32
    %1 = arith.addi %0, %arg1 : i32
    %c2_i32_0 = arith.constant 2 : i32
    %2 = arith.minsi %1, %c2_i32_0 : i32
    %c0_i32 = arith.constant 0 : i32
    %c0_i32_1 = arith.constant 0 : i32
    return %2, %c0_i32 : i32, i32
  }
  func.func @transform_2(%arg0: i32, %arg1: i32, %arg2: memref<1xf32, #tpu.memory_space<smem>>) -> (i32, i32) {
    %c0_i32 = arith.constant 0 : i32
    %c0_i32_0 = arith.constant 0 : i32
    %c0_i32_1 = arith.constant 0 : i32
    return %c0_i32, %c0_i32_0 : i32, i32
  }
  func.func @transform_3(%arg0: i32, %arg1: i32, %arg2: memref<1xf32, #tpu.memory_space<smem>>) -> (i32, i32, i32) {
    %c0_i32 = arith.constant 0 : i32
    %c0_i32_0 = arith.constant 0 : i32
    %c0_i32_1 = arith.constant 0 : i32
    return %arg0, %c0_i32, %c0_i32_0 : i32, i32, i32
  }
  func.func @transform_4(%arg0: i32, %arg1: i32, %arg2: memref<1xf32, #tpu.memory_space<smem>>) -> (i32, i32, i32) {
    %c0_i32 = arith.constant 0 : i32
    %c0_i32_0 = arith.constant 0 : i32
    %c0_i32_1 = arith.constant 0 : i32
    return %arg0, %c0_i32, %c0_i32_0 : i32, i32, i32
  }
}

</mosaic_0001>

<llo_original>
// kernel: tpu_custom_call.1
$region0: #{tpu_custom_call.1}
  #allocation0 [shape = 'u32[]', space=smem, size = 0x4, offset = 0x4, fixed_abs, tag = 'smem constant byte address 0x4 - core index']
  #allocation1 [shape = 'u32[144,128]{1,0:T(1,128)}', space=vmem, size = 0x12000, scoped, tag = 'internal scratch']
  #allocation2 [shape = 's32[1]{0}', space=sflag, size = 0x4, scoped, tag = 'scoped memory for tpu_custom_call.1']
  #allocation3 [shape = 'f32[1]{0:T(128)S(6)}', space=smem, size = 0x200, scoped, tag = 'prefetched SMEM operand 0']
  %s0 = inlined_call_operand.<no memory space> [shape: f32[1], index: 0, kind: input, shape index: {}]
  %s1 = inlined_call_operand.hbm [shape: f32[20,4224], index: 1, kind: input, shape index: {}]
  %s2 = inlined_call_operand.hbm [shape: f32[20,4224], index: 2, kind: input, shape index: {}]
  %s3 = inlined_call_operand.hbm [shape: f32[1,4224], index: 3, kind: input, shape index: {}]
  %s4 = inlined_call_operand.vmem [shape: f32[2,1,1], index: 4, kind: output, shape index: {0}]
  %s5 = inlined_call_operand.hbm [shape: f32[2,1,4224], index: 5, kind: output, shape index: {1}]
  %6 = xla_tuple %s4, %s5
  %s7 = sld [smem:[#allocation0]]
  $region69: #{tpu_custom_call.1} parent=0
    _
  %s9 = ssub.s32 1, %s7
  %s10 = scalar_select 0, %s9, %s7
  %11 = sst [smem:[#allocation3]] %s0
  $region1: #{tpu_custom_call.1} parent=0
    #allocation4 [shape = 'u8[270336]{0}', space=vmem, size = 0x42000, scoped, tag = 'input window, operand 1']
    #allocation5 [shape = 's32[2]{0}', space=sflag, size = 0x8, scoped, tag = 'scoped memory for tpu_custom_call.1']
    #allocation6 [shape = 's32[2]{0}', space=sflag, size = 0x8, scoped, tag = 'scoped memory for tpu_custom_call.1']
    #allocation7 [shape = 'u8[270336]{0}', space=vmem, size = 0x42000, scoped, tag = 'input window, operand 2']
    #allocation8 [shape = 's32[2]{0}', space=sflag, size = 0x8, scoped, tag = 'scoped memory for tpu_custom_call.1']
    #allocation9 [shape = 'u8[16896]{0}', space=vmem, size = 0x4400, scoped, tag = 'input window, operand 3, single buffered']
    #allocation10 [shape = 'u8[33792]{0}', space=vmem, size = 0x8400, scoped, tag = 'output window, operand 1']
    %12 = vsyncpa [#allocation5], 0
    %s13 = scalar_lea.sflag [#allocation5], 1
    %14 = vsyncpa %s13, 0
    %15 = vsyncpa [#allocation8], 0
    %s16 = scalar_lea.sflag [#allocation8], 1
    %17 = vsyncpa %s16, 0
    %18 = vsyncpa [#allocation6], 0
    %s19 = scalar_lea.sflag [#allocation6], 1
    %20 = vsyncpa %s19, 0
    loop: start=0, step=1, limit=6
    $region2: #{tpu_custom_call.1} parent=1 // loop_pre_header
      _
    $region3: #{tpu_custom_call.1} parent=1 // loop_header
      %s22 = sphi 0, %s26
      %p23 = scmp.ge.s32.totalorder %s22, 6
      %s29 = sphi 0, %s41
      %s30 = sphi 0, %s37
      %s31 = sphi 0, %s29
      %s32 = sphi 0, %s30
      %s33 = sphi 0, %s31
      %s34 = sphi 0, %s32
      %s52 = sphi 0, %s54
      %s55 = sphi 0, %s52
      %s56 = sphi 0, %s55
      %s72 = sphi 0, %s56
      %s86 = sphi 0, %s88
      %s89 = sphi 0, %s86
      %s90 = sphi 0, %s89
      %s106 = sphi 0, %s90
      %s110 = sphi 0, %s110
      %s112 = sphi 0, %s110
      %s113 = sphi 0, %s112
      %s127 = sphi 0, %s113
      %s133 = sphi 0, %s135
      %s136 = sphi 0, %s133
      %s137 = sphi 0, %s136
      %s153 = sphi 0, %s137
      %s159 = sphi 0, %s161
      %s162 = sphi 0, %s159
      %s163 = sphi 0, %s162
      %s179 = sphi 0, %s163
    $region4: #{tpu_custom_call.1} parent=1 // loop_header_branch
      %25 = sbr.rel (%p23) target = $region8
    $region5: #{tpu_custom_call.1} parent=1 // loop_body
      %s27 = ssub.s32 %s22, 1
      %s28 = ssub.s32 %s22, 2
      %s35 = sadd.s32 1, %s30
      %p36 = scmp.ge.s32.totalorder %s35, 2
      %s37 = scalar_select %p36, 0, %s35
      %s38 = sadd.s32 1, %s29
      %s39 = scalar_select %p36, %s38, %s29
      %p40 = scmp.ge.s32.totalorder %s39, 2
      %s41 = scalar_select %p40, 0, %s39
      %s42 = smul.u32 %s29, 2
      %s43 = sadd.s32 %s42, %s30
      %p44 = scmp.lt.s32.totalorder %s43, 2
      %s45 = scalar_select %p44, %s43, 2
      %s46 = smul.u32 %s41, 2
      %s47 = sadd.s32 %s46, %s37
      %p48 = scmp.lt.s32.totalorder %s47, 2
      %s49 = scalar_select %p48, %s47, 2
      %s50 = ssub.s32 %s45, %s49
      %p51 = scmp.eq.s32.totalorder %s50, 0
      %s53 = sadd.s32 %s52, 1
      %s54 = scalar_select %p51, %s52, %s53
      %p57 = pneg %p51
      %p58 = scmp.eq.s32.totalorder %s22, 3
      %p59 = por %p57, %p58
      %p60 = scmp.ne.s32.totalorder %s52, %s55
      %p61 = scmp.eq.s32.totalorder %s22, 0
      %p62 = por %p60, %p61
      %p63 = scmp.ne.s32.totalorder %s52, %s55
      %p64 = scmp.eq.s32.totalorder %s27, 3
      %p65 = por %p63, %p64
      %p66 = scmp.ne.s32.totalorder %s55, %s56
      %p67 = scmp.eq.s32.totalorder %s27, 0
      %p68 = por %p66, %p67
      %p69 = scmp.ne.s32.totalorder %s55, %s56
      %p70 = scmp.eq.s32.totalorder %s28, 3
      %p71 = por %p69, %p70
      %p73 = scmp.ne.s32.totalorder %s56, %s72
      %p74 = scmp.eq.s32.totalorder %s28, 0
      %p75 = por %p73, %p74
      %s76 = smul.u32 %s29, 2
      %s77 = sadd.s32 %s76, %s30
      %p78 = scmp.lt.s32.totalorder %s77, 2
      %s79 = scalar_select %p78, %s77, 2
      %s80 = smul.u32 %s41, 2
      %s81 = sadd.s32 %s80, %s37
      %p82 = scmp.lt.s32.totalorder %s81, 2
      %s83 = scalar_select %p82, %s81, 2
      %s84 = ssub.s32 %s79, %s83
      %p85 = scmp.eq.s32.totalorder %s84, 0
      %s87 = sadd.s32 %s86, 1
      %s88 = scalar_select %p85, %s86, %s87
      %p91 = pneg %p85
      %p92 = scmp.eq.s32.totalorder %s22, 3
      %p93 = por %p91, %p92
      %p94 = scmp.ne.s32.totalorder %s86, %s89
      %p95 = scmp.eq.s32.totalorder %s22, 0
      %p96 = por %p94, %p95
      %p97 = scmp.ne.s32.totalorder %s86, %s89
      %p98 = scmp.eq.s32.totalorder %s27, 3
      %p99 = por %p97, %p98
      %p100 = scmp.ne.s32.totalorder %s89, %s90
      %p101 = scmp.eq.s32.totalorder %s27, 0
      %p102 = por %p100, %p101
      %p103 = scmp.ne.s32.totalorder %s89, %s90
      %p104 = scmp.eq.s32.totalorder %s28, 3
      %p105 = por %p103, %p104
      %p107 = scmp.ne.s32.totalorder %s90, %s106
      %p108 = scmp.eq.s32.totalorder %s28, 0
      %p109 = por %p107, %p108
      %s111 = sadd.s32 %s110, 1
      %p114 = scmp.eq.s32.totalorder %s22, 3
      %p115 = scmp.ne.s32.totalorder %s110, %s112
      %p116 = scmp.eq.s32.totalorder %s22, 0
      %p117 = por %p115, %p116
      %p118 = scmp.ne.s32.totalorder %s110, %s112
      %p119 = scmp.eq.s32.totalorder %s27, 3
      %p120 = por %p118, %p119
      %p121 = scmp.ne.s32.totalorder %s112, %s113
      %p122 = scmp.eq.s32.totalorder %s27, 0
      %p123 = por %p121, %p122
      %p124 = scmp.ne.s32.totalorder %s112, %s113
      %p125 = scmp.eq.s32.totalorder %s28, 3
      %p126 = por %p124, %p125
      %p128 = scmp.ne.s32.totalorder %s113, %s127
      %p129 = scmp.eq.s32.totalorder %s28, 0
      %p130 = por %p128, %p129
      %s131 = ssub.s32 %s29, %s41
      %p132 = scmp.eq.s32.totalorder %s131, 0
      %s134 = sadd.s32 %s133, 1
      %s135 = scalar_select %p132, %s133, %s134
      %p138 = pneg %p132
      %p139 = scmp.eq.s32.totalorder %s22, 3
      %p140 = por %p138, %p139
      %p141 = scmp.ne.s32.totalorder %s133, %s136
      %p142 = scmp.eq.s32.totalorder %s22, 0
      %p143 = por %p141, %p142
      %p144 = scmp.ne.s32.totalorder %s133, %s136
      %p145 = scmp.eq.s32.totalorder %s27, 3
      %p146 = por %p144, %p145
      %p147 = scmp.ne.s32.totalorder %s136, %s137
      %p148 = scmp.eq.s32.totalorder %s27, 0
      %p149 = por %p147, %p148
      %p150 = scmp.ne.s32.totalorder %s136, %s137
      %p151 = scmp.eq.s32.totalorder %s28, 3
      %p152 = por %p150, %p151
      %p154 = scmp.ne.s32.totalorder %s137, %s153
      %p155 = scmp.eq.s32.totalorder %s28, 0
      %p156 = por %p154, %p155
      %s157 = ssub.s32 %s29, %s41
      %p158 = scmp.eq.s32.totalorder %s157, 0
      %s160 = sadd.s32 %s159, 1
      %s161 = scalar_select %p158, %s159, %s160
      %p164 = pneg %p158
      %p165 = scmp.eq.s32.totalorder %s22, 3
      %p166 = por %p164, %p165
      %p167 = scmp.ne.s32.totalorder %s159, %s162
      %p168 = scmp.eq.s32.totalorder %s22, 0
      %p169 = por %p167, %p168
      %p170 = scmp.ne.s32.totalorder %s159, %s162
      %p171 = scmp.eq.s32.totalorder %s27, 3
      %p172 = por %p170, %p171
      %p173 = scmp.ne.s32.totalorder %s162, %s163
      %p174 = scmp.eq.s32.totalorder %s27, 0
      %p175 = por %p173, %p174
      %p176 = scmp.ne.s32.totalorder %s162, %s163
      %p177 = scmp.eq.s32.totalorder %s28, 3
      %p178 = por %p176, %p177
      %p180 = scmp.ne.s32.totalorder %s163, %s179
      %p181 = scmp.eq.s32.totalorder %s28, 0
      %p182 = por %p180, %p181
      %p183 = scmp.le.s32.totalorder 1, %s22
      %p184 = scmp.lt.s32.totalorder %s22, 5
      %p185 = pnand %p183, %p184
      %p186 = pneg %p185
      // Predicated region
      $region9: #{tpu_custom_call.1} parent=5 // pred_check
        _
      $region10: #{tpu_custom_call.1} parent=5 // pred_check_branch
        %188 = sbr.rel (%p185) target = $region12
      $region11: #{tpu_custom_call.1} parent=5 // pred_region
        %s189 = ssub.s32 %s22, 1
        // Predicated region
        $region13: #{tpu_custom_call.1} parent=11 // pred_check
          %p190 = pneg %p123
        $region14: #{tpu_custom_call.1} parent=11 // pred_check_branch
          %192 = sbr.rel (%p190) target = $region16
        $region15: #{tpu_custom_call.1} parent=11 // pred_region
          %s194 = ssub.s32 528, 528
          %195 = vsyncadd [#allocation8], %s194
          %s197 = sshll.u32 [#allocation9], 4
          %s198 = int_to_ptr.vmem [resolvable:$true] %s197
          %200 = dma.hbm_to_vmem [thread:$0]  %s3, 528, %s198, [#allocation8]
        $region16: #{tpu_custom_call.1} parent=11 // pred_fallthru
          _
      $region12: #{tpu_custom_call.1} parent=5 // pred_fallthru
        _
      %p201 = scmp.lt.s32.totalorder %s22, 4
      // Predicated region
      $region17: #{tpu_custom_call.1} parent=5 // pred_check
        %p202 = pneg %p201
      $region18: #{tpu_custom_call.1} parent=5 // pred_check_branch
        %204 = sbr.rel (%p202) target = $region20
      $region19: #{tpu_custom_call.1} parent=5 // pred_region
        // Predicated region
        $region21: #{tpu_custom_call.1} parent=19 // pred_check
          %p205 = pneg %p62
        $region22: #{tpu_custom_call.1} parent=19 // pred_check_branch
          %207 = sbr.rel (%p205) target = $region24
        $region23: #{tpu_custom_call.1} parent=19 // pred_region
          %s208 = sand.u32 %s52, 1
          %s209 = scalar_lea.sflag [#allocation5], %s208
          %s210 = sand.u32 %s52, 1
          %s211 = smul.addr %s210, 264
          %s212 = scalar_lea.vmem [#allocation4], %s211
          %s213 = smul.u32 %s29, 2
          %s214 = sadd.s32 %s213, %s30
          %p215 = scmp.lt.s32.totalorder %s214, 2
          %s216 = scalar_select %p215, %s214, 2
          %s218 = ssub.s32 4224, 4224
          %219 = vsyncadd %s209, %s218
          %s220 = smul.addr %s216, 33
          %s221 = smul.addr %s220, 128
          %s222 = scalar_lea.hbm %s1, %s221
          %s224 = sshll.u32 %s212, 4
          %s225 = int_to_ptr.vmem [resolvable:$true] %s224
          %227 = dma.hbm_to_vmem [thread:$0]  %s222, 4224, %s225, %s209
        $region24: #{tpu_custom_call.1} parent=19 // pred_fallthru
          _
        // Predicated region
        $region25: #{tpu_custom_call.1} parent=19 // pred_check
          %p228 = pneg %p96
        $region26: #{tpu_custom_call.1} parent=19 // pred_check_branch
          %230 = sbr.rel (%p228) target = $region28
        $region27: #{tpu_custom_call.1} parent=19 // pred_region
          %s231 = sand.u32 %s22, 1
          %s232 = scalar_lea.sflag [#allocation8], %s231
          %s233 = sand.u32 %s86, 1
          %s234 = smul.addr %s233, 264
          %s235 = scalar_lea.vmem [#allocation7], %s234
          %s236 = smul.u32 %s29, 2
          %s237 = sadd.s32 %s236, %s30
          %p238 = scmp.lt.s32.totalorder %s237, 2
          %s239 = scalar_select %p238, %s237, 2
          %s241 = ssub.s32 4224, 4224
          %242 = vsyncadd %s232, %s241
          %s243 = smul.addr %s239, 33
          %s244 = smul.addr %s243, 128
          %s245 = scalar_lea.hbm %s2, %s244
          %s247 = sshll.u32 %s235, 4
          %s248 = int_to_ptr.vmem [resolvable:$true] %s247
          %250 = dma.hbm_to_vmem [thread:$0]  %s245, 4224, %s248, %s232
        $region28: #{tpu_custom_call.1} parent=19 // pred_fallthru
          _
      $region20: #{tpu_custom_call.1} parent=5 // pred_fallthru
        _
      %p251 = scmp.le.s32.totalorder 1, %s22
      %p252 = scmp.lt.s32.totalorder %s22, 5
      %p253 = pnand %p251, %p252
      %p254 = pneg %p253
      // Predicated region
      $region29: #{tpu_custom_call.1} parent=5 // pred_check
        _
      $region30: #{tpu_custom_call.1} parent=5 // pred_check_branch
        %256 = sbr.rel (%p253) target = $region32
      $region31: #{tpu_custom_call.1} parent=5 // pred_region
        %s257 = ssub.s32 %s22, 1
        %s258 = sand.u32 %s55, 1
        %s259 = scalar_lea.sflag [#allocation5], %s258
        %s260 = sand.u32 %s55, 1
        %s261 = smul.addr %s260, 264
        %s262 = scalar_lea.vmem [#allocation4], %s261
        // Predicated region
        $region33: #{tpu_custom_call.1} parent=31 // pred_check
          %p263 = pneg %p68
        $region34: #{tpu_custom_call.1} parent=31 // pred_check_branch
          %265 = sbr.rel (%p263) target = $region36
        $region35: #{tpu_custom_call.1} parent=31 // pred_region
          %266 = dma.done %s259, 4224
        $region36: #{tpu_custom_call.1} parent=31 // pred_fallthru
          _
        %s267 = sand.u32 %s27, 1
        %s268 = scalar_lea.sflag [#allocation8], %s267
        %s269 = sand.u32 %s89, 1
        %s270 = smul.addr %s269, 264
        %s271 = scalar_lea.vmem [#allocation7], %s270
        // Predicated region
        $region37: #{tpu_custom_call.1} parent=31 // pred_check
          %p272 = pneg %p102
        $region38: #{tpu_custom_call.1} parent=31 // pred_check_branch
          %274 = sbr.rel (%p272) target = $region40
        $region39: #{tpu_custom_call.1} parent=31 // pred_region
          %275 = dma.done %s268, 4224
        $region40: #{tpu_custom_call.1} parent=31 // pred_fallthru
          _
        // Predicated region
        $region41: #{tpu_custom_call.1} parent=31 // pred_check
          %p276 = pneg %p123
        $region42: #{tpu_custom_call.1} parent=31 // pred_check_branch
          %278 = sbr.rel (%p276) target = $region44
        $region43: #{tpu_custom_call.1} parent=31 // pred_region
          %279 = dma.done [#allocation8], 528
        $region44: #{tpu_custom_call.1} parent=31 // pred_fallthru
          _
        %s280 = sand.u32 %s55, 1
        %s281 = scalar_lea.sflag [#allocation5], %s280
        %s282 = sand.u32 %s55, 1
        %s283 = smul.addr %s282, 264
        %s284 = scalar_lea.vmem [#allocation4], %s283
        %p285 = pneg %p68
        %p286 = pneg %p65
        %s287 = sand.u32 %s27, 1
        %s288 = scalar_lea.sflag [#allocation8], %s287
        %s289 = sand.u32 %s89, 1
        %s290 = smul.addr %s289, 264
        %s291 = scalar_lea.vmem [#allocation7], %s290
        %p292 = pneg %p102
        %p293 = pneg %p99
        %p294 = pneg %p123
        %p295 = pneg %p120
        %p296 = pneg %p149
        %p297 = pneg %p146
        %p298 = scmp.lt.s32.totalorder %s31, 1
        %s299 = scalar_select %p298, %s31, 1
        %s300 = scalar_lea.vmem %s4, %s299
        %p301 = pneg %p175
        %p302 = pneg %p172
        %s303 = sand.u32 %s162, 1
        %s304 = scalar_lea.sflag [#allocation6], %s303
        %s305 = sand.u32 %s162, 1
        %s306 = smul.addr %s305, 33
        %s307 = scalar_lea.vmem [#allocation10], %s306
        %s308 = smul.u32 %s31, 2
        %s309 = sadd.s32 %s308, %s32
        %p310 = scmp.lt.s32.totalorder %s309, 2
        %s311 = scalar_select %p310, %s309, 2
        %s312 = smul.u32 %s31, 2
        %s313 = sadd.s32 %s312, %s32
        %p314 = scmp.lt.s32.totalorder %s313, 2
        %s315 = scalar_select %p314, %s313, 2
        %p316 = scmp.lt.s32.totalorder %s31, 1
        %s317 = scalar_select %p316, %s31, 1
        %s318 = scalar_lea.vmem %s4, %s317
        %p319 = scmp.eq.s32.totalorder %s32, 0
        // Predicated region
        $region45: #{tpu_custom_call.1} parent=31 // pred_check
          %p320 = pneg %p319
        $region46: #{tpu_custom_call.1} parent=31 // pred_check_branch
          %322 = sbr.rel (%p320) target = $region48
        $region47: #{tpu_custom_call.1} parent=31 // pred_region
          %vm323 = vcmask 0
          %324 = vst.msk [vmem:[%s318] sm:$0x1] %vm323, 0.0
          %325 = vst [vmem:[%s307] sm:$0xff] 0.0
          %326 = vst [vmem:[%s307 + $0x8] sm:$0xff] 0.0
          %327 = vst [vmem:[%s307 + $0x10] sm:$0xff] 0.0
          %328 = vst [vmem:[%s307 + $0x18] sm:$0xff] 0.0
          %v329 = vlaneseq
          %vm330 = vcmp.ge.s32.totalorder %v329, 0
          %vm331 = vcmp.lt.s32.totalorder %v329, 128
          %vm332 = vmand %vm330, %vm331
          %333 = vst.msk [vmem:[%s307 + $0x20] sm:$0x1] %vm332, 0.0
        $region48: #{tpu_custom_call.1} parent=31 // pred_fallthru
          _
        %s334 = sld [smem:[#allocation3]]
        %v335 = vld [vmem:[%s271] sm:$0xff]
        %v336 = vld [vmem:[%s271 + $0x8] sm:$0xff]
        %v337 = vld [vmem:[%s271 + $0x10] sm:$0xff]
        %v338 = vld [vmem:[%s271 + $0x18] sm:$0xff]
        %v339 = vld [vmem:[%s271 + $0x20] sm:$0xff]
        %v340 = vld [vmem:[%s271 + $0x28] sm:$0xff]
        %v341 = vld [vmem:[%s271 + $0x30] sm:$0xff]
        %v342 = vld [vmem:[%s271 + $0x38] sm:$0xff]
        %v343 = vld [vmem:[%s271 + $0x40] sm:$0xff]
        %v344 = vld [vmem:[%s271 + $0x48] sm:$0xff]
        %v345 = vld [vmem:[%s271 + $0x50] sm:$0xff]
        %v346 = vld [vmem:[%s271 + $0x58] sm:$0xff]
        %v347 = vld [vmem:[%s271 + $0x60] sm:$0xff]
        %v348 = vld [vmem:[%s271 + $0x68] sm:$0xff]
        %v349 = vld [vmem:[%s271 + $0x70] sm:$0xff]
        %v350 = vld [vmem:[%s271 + $0x78] sm:$0xff]
        %v351 = vld [vmem:[%s271 + $0x80] sm:$0xff]
        %v352 = vld [vmem:[%s271 + $0x88] sm:$0xff]
        %v353 = vld [vmem:[%s271 + $0x90] sm:$0xff]
        %v354 = vld [vmem:[%s271 + $0x98] sm:$0xff]
        %v355 = vld [vmem:[%s271 + $0xa0] sm:$0xff]
        %v356 = vld [vmem:[%s271 + $0xa8] sm:$0xff]
        %v357 = vld [vmem:[%s271 + $0xb0] sm:$0xff]
        %v358 = vld [vmem:[%s271 + $0xb8] sm:$0xff]
        %v359 = vld [vmem:[%s271 + $0xc0] sm:$0xff]
        %v360 = vld [vmem:[%s271 + $0xc8] sm:$0xff]
        %v361 = vld [vmem:[%s271 + $0xd0] sm:$0xff]
        %v362 = vld [vmem:[%s271 + $0xd8] sm:$0xff]
        %v363 = vld [vmem:[%s271 + $0xe0] sm:$0xff]
        %v364 = vld [vmem:[%s271 + $0xe8] sm:$0xff]
        %v365 = vld [vmem:[%s271 + $0xf0] sm:$0xff]
        %v366 = vld [vmem:[%s271 + $0xf8] sm:$0xff]
        %v367 = vld [vmem:[%s271 + $0x100] sm:$0xff]
        %v368 = vld [vmem:[#allocation9] sm:$0xff]
        %v369 = vld [vmem:[#allocation9 + $0x8] sm:$0xff]
        %v370 = vld [vmem:[#allocation9 + $0x10] sm:$0xff]
        %v371 = vld [vmem:[#allocation9 + $0x18] sm:$0xff]
        %v372 = vld [vmem:[#allocation9 + $0x20] sm:$0x1]
        %v378 = vlaneseq
        %v379 = vshrl.u32 %v378, 7
        %v380 = vsub.s32 0, %v379
        %v381 = vrot.slane %v368, %v380
        %v382 = vlaneseq
        %v383 = vshrl.u32 %v382, 7
        %v384 = vsub.s32 1, %v383
        %v385 = vrot.slane %v368, %v384
        %v386 = vlaneseq
        %v387 = vshrl.u32 %v386, 7
        %v388 = vsub.s32 2, %v387
        %v389 = vrot.slane %v368, %v388
        %v390 = vlaneseq
        %v391 = vshrl.u32 %v390, 7
        %v392 = vsub.s32 3, %v391
        %v393 = vrot.slane %v368, %v392
        %v394 = vlaneseq
        %v395 = vshrl.u32 %v394, 7
        %v396 = vsub.s32 4, %v395
        %v397 = vrot.slane %v368, %v396
        %v398 = vlaneseq
        %v399 = vshrl.u32 %v398, 7
        %v400 = vsub.s32 5, %v399
        %v401 = vrot.slane %v368, %v400
        %v402 = vlaneseq
        %v403 = vshrl.u32 %v402, 7
        %v404 = vsub.s32 6, %v403
        %v405 = vrot.slane %v368, %v404
        %v406 = vlaneseq
        %v407 = vshrl.u32 %v406, 7
        %v408 = vsub.s32 7, %v407
        %v409 = vrot.slane %v368, %v408
        %v410 = vlaneseq
        %v411 = vshrl.u32 %v410, 7
        %v412 = vsub.s32 0, %v411
        %v413 = vrot.slane %v369, %v412
        %v414 = vlaneseq
        %v415 = vshrl.u32 %v414, 7
        %v416 = vsub.s32 1, %v415
        %v417 = vrot.slane %v369, %v416
        %v418 = vlaneseq
        %v419 = vshrl.u32 %v418, 7
        %v420 = vsub.s32 2, %v419
        %v421 = vrot.slane %v369, %v420
        %v422 = vlaneseq
        %v423 = vshrl.u32 %v422, 7
        %v424 = vsub.s32 3, %v423
        %v425 = vrot.slane %v369, %v424
        %v426 = vlaneseq
        %v427 = vshrl.u32 %v426, 7
        %v428 = vsub.s32 4, %v427
        %v429 = vrot.slane %v369, %v428
        %v430 = vlaneseq
        %v431 = vshrl.u32 %v430, 7
        %v432 = vsub.s32 5, %v431
        %v433 = vrot.slane %v369, %v432
        %v434 = vlaneseq
        %v435 = vshrl.u32 %v434, 7
        %v436 = vsub.s32 6, %v435
        %v437 = vrot.slane %v369, %v436
        %v438 = vlaneseq
        %v439 = vshrl.u32 %v438, 7
        %v440 = vsub.s32 7, %v439
        %v441 = vrot.slane %v369, %v440
        %v442 = vlaneseq
        %v443 = vshrl.u32 %v442, 7
        %v444 = vsub.s32 0, %v443
        %v445 = vrot.slane %v370, %v444
        %v446 = vlaneseq
        %v447 = vshrl.u32 %v446, 7
        %v448 = vsub.s32 1, %v447
        %v449 = vrot.slane %v370, %v448
        %v450 = vlaneseq
        %v451 = vshrl.u32 %v450, 7
        %v452 = vsub.s32 2, %v451
        %v453 = vrot.slane %v370, %v452
        %v454 = vlaneseq
        %v455 = vshrl.u32 %v454, 7
        %v456 = vsub.s32 3, %v455
        %v457 = vrot.slane %v370, %v456
        %v458 = vlaneseq
        %v459 = vshrl.u32 %v458, 7
        %v460 = vsub.s32 4, %v459
        %v461 = vrot.slane %v370, %v460
        %v462 = vlaneseq
        %v463 = vshrl.u32 %v462, 7
        %v464 = vsub.s32 5, %v463
        %v465 = vrot.slane %v370, %v464
        %v466 = vlaneseq
        %v467 = vshrl.u32 %v466, 7
        %v468 = vsub.s32 6, %v467
        %v469 = vrot.slane %v370, %v468
        %v470 = vlaneseq
        %v471 = vshrl.u32 %v470, 7
        %v472 = vsub.s32 7, %v471
        %v473 = vrot.slane %v370, %v472
        %v474 = vlaneseq
        %v475 = vshrl.u32 %v474, 7
        %v476 = vsub.s32 0, %v475
        %v477 = vrot.slane %v371, %v476
        %v478 = vlaneseq
        %v479 = vshrl.u32 %v478, 7
        %v480 = vsub.s32 1, %v479
        %v481 = vrot.slane %v371, %v480
        %v482 = vlaneseq
        %v483 = vshrl.u32 %v482, 7
        %v484 = vsub.s32 2, %v483
        %v485 = vrot.slane %v371, %v484
        %v486 = vlaneseq
        %v487 = vshrl.u32 %v486, 7
        %v488 = vsub.s32 3, %v487
        %v489 = vrot.slane %v371, %v488
        %v490 = vlaneseq
        %v491 = vshrl.u32 %v490, 7
        %v492 = vsub.s32 4, %v491
        %v493 = vrot.slane %v371, %v492
        %v494 = vlaneseq
        %v495 = vshrl.u32 %v494, 7
        %v496 = vsub.s32 5, %v495
        %v497 = vrot.slane %v371, %v496
        %v498 = vlaneseq
        %v499 = vshrl.u32 %v498, 7
        %v500 = vsub.s32 6, %v499
        %v501 = vrot.slane %v371, %v500
        %v502 = vlaneseq
        %v503 = vshrl.u32 %v502, 7
        %v504 = vsub.s32 7, %v503
        %v505 = vrot.slane %v371, %v504
        %v506 = vlaneseq
        %v507 = vshrl.u32 %v506, 7
        %v508 = vsub.s32 0, %v507
        %v509 = vrot.slane %v372, %v508
        %v543 = vsub.f32 %v335, %v381
        %v544 = vsub.f32 %v336, %v385
        %v545 = vsub.f32 %v337, %v389
        %v546 = vsub.f32 %v338, %v393
        %v547 = vsub.f32 %v339, %v397
        %v548 = vsub.f32 %v340, %v401
        %v549 = vsub.f32 %v341, %v405
        %v550 = vsub.f32 %v342, %v409
        %v551 = vsub.f32 %v343, %v413
        %v552 = vsub.f32 %v344, %v417
        %v553 = vsub.f32 %v345, %v421
        %v554 = vsub.f32 %v346, %v425
        %v555 = vsub.f32 %v347, %v429
        %v556 = vsub.f32 %v348, %v433
        %v557 = vsub.f32 %v349, %v437
        %v558 = vsub.f32 %v350, %v441
        %v559 = vsub.f32 %v351, %v445
        %v560 = vsub.f32 %v352, %v449
        %v561 = vsub.f32 %v353, %v453
        %v562 = vsub.f32 %v354, %v457
        %v563 = vsub.f32 %v355, %v461
        %v564 = vsub.f32 %v356, %v465
        %v565 = vsub.f32 %v357, %v469
        %v566 = vsub.f32 %v358, %v473
        %v567 = vsub.f32 %v359, %v477
        %v568 = vsub.f32 %v360, %v481
        %v569 = vsub.f32 %v361, %v485
        %v570 = vsub.f32 %v362, %v489
        %v571 = vsub.f32 %v363, %v493
        %v572 = vsub.f32 %v364, %v497
        %v573 = vsub.f32 %v365, %v501
        %v574 = vsub.f32 %v366, %v505
        %v575 = vsub.f32 %v367, %v509
        %v576 = vstv %s334
        %v577 = vmul.f32 %v543, %v576
        %v578 = vmul.f32 %v544, %v576
        %v579 = vmul.f32 %v545, %v576
        %v580 = vmul.f32 %v546, %v576
        %v581 = vmul.f32 %v547, %v576
        %v582 = vmul.f32 %v548, %v576
        %v583 = vmul.f32 %v549, %v576
        %v584 = vmul.f32 %v550, %v576
        %v585 = vmul.f32 %v551, %v576
        %v586 = vmul.f32 %v552, %v576
        %v587 = vmul.f32 %v553, %v576
        %v588 = vmul.f32 %v554, %v576
        %v589 = vmul.f32 %v555, %v576
        %v590 = vmul.f32 %v556, %v576
        %v591 = vmul.f32 %v557, %v576
        %v592 = vmul.f32 %v558, %v576
        %v593 = vmul.f32 %v559, %v576
        %v594 = vmul.f32 %v560, %v576
        %v595 = vmul.f32 %v561, %v576
        %v596 = vmul.f32 %v562, %v576
        %v597 = vmul.f32 %v563, %v576
        %v598 = vmul.f32 %v564, %v576
        %v599 = vmul.f32 %v565, %v576
        %v600 = vmul.f32 %v566, %v576
        %v601 = vmul.f32 %v567, %v576
        %v602 = vmul.f32 %v568, %v576
        %v603 = vmul.f32 %v569, %v576
        %v604 = vmul.f32 %v570, %v576
        %v605 = vmul.f32 %v571, %v576
        %v606 = vmul.f32 %v572, %v576
        %v607 = vmul.f32 %v573, %v576
        %v608 = vmul.f32 %v574, %v576
        %v609 = vmul.f32 %v575, %v576
        %v610 = vmax.f32 %v577, %v581
        %v611 = vmax.f32 %v578, %v582
        %v612 = vmax.f32 %v579, %v583
        %v613 = vmax.f32 %v580, %v584
        %v614 = vmax.f32 %v610, %v585
        %v615 = vmax.f32 %v611, %v586
        %v616 = vmax.f32 %v612, %v587
        %v617 = vmax.f32 %v613, %v588
        %v618 = vmax.f32 %v614, %v589
        %v619 = vmax.f32 %v615, %v590
        %v620 = vmax.f32 %v616, %v591
        %v621 = vmax.f32 %v617, %v592
        %v622 = vmax.f32 %v618, %v593
        %v623 = vmax.f32 %v619, %v594
        %v624 = vmax.f32 %v620, %v595
        %v625 = vmax.f32 %v621, %v596
        %v626 = vmax.f32 %v622, %v597
        %v627 = vmax.f32 %v623, %v598
        %v628 = vmax.f32 %v624, %v599
        %v629 = vmax.f32 %v625, %v600
        %v630 = vmax.f32 %v626, %v601
        %v631 = vmax.f32 %v627, %v602
        %v632 = vmax.f32 %v628, %v603
        %v633 = vmax.f32 %v629, %v604
        %v634 = vmax.f32 %v630, %v605
        %v635 = vmax.f32 %v631, %v606
        %v636 = vmax.f32 %v632, %v607
        %v637 = vmax.f32 %v633, %v608
        %v638 = vmax.f32 %v634, %v609
        %v639 = vmax.f32 %v638, %v635
        %v640 = vmax.f32 %v636, %v637
        %v641 = vmax.f32 %v639, %v640
        %642 = vmax.xlane.f32.xlu0 %v641
        %v643 = vpop.xlane.xlu0 %642
        %v644 = vsub.f32 %v577, %v643
        %v645 = vsub.f32 %v578, %v643
        %v646 = vsub.f32 %v579, %v643
        %v647 = vsub.f32 %v580, %v643
        %v648 = vsub.f32 %v581, %v643
        %v649 = vsub.f32 %v582, %v643
        %v650 = vsub.f32 %v583, %v643
        %v651 = vsub.f32 %v584, %v643
        %v652 = vsub.f32 %v585, %v643
        %v653 = vsub.f32 %v586, %v643
        %v654 = vsub.f32 %v587, %v643
        %v655 = vsub.f32 %v588, %v643
        %v656 = vsub.f32 %v589, %v643
        %v657 = vsub.f32 %v590, %v643
        %v658 = vsub.f32 %v591, %v643
        %v659 = vsub.f32 %v592, %v643
        %v660 = vsub.f32 %v593, %v643
        %v661 = vsub.f32 %v594, %v643
        %v662 = vsub.f32 %v595, %v643
        %v663 = vsub.f32 %v596, %v643
        %v664 = vsub.f32 %v597, %v643
        %v665 = vsub.f32 %v598, %v643
        %v666 = vsub.f32 %v599, %v643
        %v667 = vsub.f32 %v600, %v643
        %v668 = vsub.f32 %v601, %v643
        %v669 = vsub.f32 %v602, %v643
        %v670 = vsub.f32 %v603, %v643
        %v671 = vsub.f32 %v604, %v643
        %v672 = vsub.f32 %v605, %v643
        %v673 = vsub.f32 %v606, %v643
        %v674 = vsub.f32 %v607, %v643
        %v675 = vsub.f32 %v608, %v643
        %v676 = vsub.f32 %v609, %v643
        %v677 = vmul.f32 %v644, 1.442695
        %v678 = vpow.pop %v677
        %v679 = vmul.f32 %v645, 1.442695
        %v680 = vpow.pop %v679
        %v681 = vmul.f32 %v646, 1.442695
        %v682 = vpow.pop %v681
        %v683 = vmul.f32 %v647, 1.442695
        %v684 = vpow.pop %v683
        %v685 = vmul.f32 %v648, 1.442695
        %v686 = vpow.pop %v685
        %v687 = vmul.f32 %v649, 1.442695
        %v688 = vpow.pop %v687
        %v689 = vmul.f32 %v650, 1.442695
        %v690 = vpow.pop %v689
        %v691 = vmul.f32 %v651, 1.442695
        %v692 = vpow.pop %v691
        %v693 = vmul.f32 %v652, 1.442695
        %v694 = vpow.pop %v693
        %v695 = vmul.f32 %v653, 1.442695
        %v696 = vpow.pop %v695
        %v697 = vmul.f32 %v654, 1.442695
        %v698 = vpow.pop %v697
        %v699 = vmul.f32 %v655, 1.442695
        %v700 = vpow.pop %v699
        %v701 = vmul.f32 %v656, 1.442695
        %v702 = vpow.pop %v701
        %v703 = vmul.f32 %v657, 1.442695
        %v704 = vpow.pop %v703
        %v705 = vmul.f32 %v658, 1.442695
        %v706 = vpow.pop %v705
        %v707 = vmul.f32 %v659, 1.442695
        %v708 = vpow.pop %v707
        %v709 = vmul.f32 %v660, 1.442695
        %v710 = vpow.pop %v709
        %v711 = vmul.f32 %v661, 1.442695
        %v712 = vpow.pop %v711
        %v713 = vmul.f32 %v662, 1.442695
        %v714 = vpow.pop %v713
        %v715 = vmul.f32 %v663, 1.442695
        %v716 = vpow.pop %v715
        %v717 = vmul.f32 %v664, 1.442695
        %v718 = vpow.pop %v717
        %v719 = vmul.f32 %v665, 1.442695
        %v720 = vpow.pop %v719
        %v721 = vmul.f32 %v666, 1.442695
        %v722 = vpow.pop %v721
        %v723 = vmul.f32 %v667, 1.442695
        %v724 = vpow.pop %v723
        %v725 = vmul.f32 %v668, 1.442695
        %v726 = vpow.pop %v725
        %v727 = vmul.f32 %v669, 1.442695
        %v728 = vpow.pop %v727
        %v729 = vmul.f32 %v670, 1.442695
        %v730 = vpow.pop %v729
        %v731 = vmul.f32 %v671, 1.442695
        %v732 = vpow.pop %v731
        %v733 = vmul.f32 %v672, 1.442695
        %v734 = vpow.pop %v733
        %v735 = vmul.f32 %v673, 1.442695
        %v736 = vpow.pop %v735
        %v737 = vmul.f32 %v674, 1.442695
        %v738 = vpow.pop %v737
        %v739 = vmul.f32 %v675, 1.442695
        %v740 = vpow.pop %v739
        %v741 = vmul.f32 %v676, 1.442695
        %v742 = vpow.pop %v741
        %v743 = vadd.f32 %v678, %v680
        %v744 = vadd.f32 %v743, %v682
        %v745 = vadd.f32 %v744, %v684
        %v746 = vadd.f32 %v745, %v686
        %v747 = vadd.f32 %v746, %v688
        %v748 = vadd.f32 %v747, %v690
        %v749 = vadd.f32 %v748, %v692
        %v750 = vadd.f32 %v749, %v694
        %v751 = vadd.f32 %v750, %v696
        %v752 = vadd.f32 %v751, %v698
        %v753 = vadd.f32 %v752, %v700
        %v754 = vadd.f32 %v753, %v702
        %v755 = vadd.f32 %v754, %v704
        %v756 = vadd.f32 %v755, %v706
        %v757 = vadd.f32 %v756, %v708
        %v758 = vadd.f32 %v757, %v710
        %v759 = vadd.f32 %v758, %v712
        %v760 = vadd.f32 %v759, %v714
        %v761 = vadd.f32 %v760, %v716
        %v762 = vadd.f32 %v761, %v718
        %v763 = vadd.f32 %v762, %v720
        %v764 = vadd.f32 %v763, %v722
        %v765 = vadd.f32 %v764, %v724
        %v766 = vadd.f32 %v765, %v726
        %v767 = vadd.f32 %v766, %v728
        %v768 = vadd.f32 %v767, %v730
        %v769 = vadd.f32 %v768, %v732
        %v770 = vadd.f32 %v769, %v734
        %v771 = vadd.f32 %v770, %v736
        %v772 = vadd.f32 %v771, %v738
        %v773 = vadd.f32 %v772, %v740
        %v774 = vadd.f32 %v773, %v742
        %775 = vadd.xlane.f32.xlu0 %v774
        %v776 = vpop.xlane.xlu0 %775
        %v777 = vld [vmem:[%s262] sm:$0xff]
        %v778 = vld [vmem:[%s262 + $0x8] sm:$0xff]
        %v779 = vld [vmem:[%s262 + $0x10] sm:$0xff]
        %v780 = vld [vmem:[%s262 + $0x18] sm:$0xff]
        %v781 = vld [vmem:[%s262 + $0x20] sm:$0xff]
        %v782 = vld [vmem:[%s262 + $0x28] sm:$0xff]
        %v783 = vld [vmem:[%s262 + $0x30] sm:$0xff]
        %v784 = vld [vmem:[%s262 + $0x38] sm:$0xff]
        %v785 = vld [vmem:[%s262 + $0x40] sm:$0xff]
        %v786 = vld [vmem:[%s262 + $0x48] sm:$0xff]
        %v787 = vld [vmem:[%s262 + $0x50] sm:$0xff]
        %v788 = vld [vmem:[%s262 + $0x58] sm:$0xff]
        %v789 = vld [vmem:[%s262 + $0x60] sm:$0xff]
        %v790 = vld [vmem:[%s262 + $0x68] sm:$0xff]
        %v791 = vld [vmem:[%s262 + $0x70] sm:$0xff]
        %v792 = vld [vmem:[%s262 + $0x78] sm:$0xff]
        %v793 = vld [vmem:[%s262 + $0x80] sm:$0xff]
        %v794 = vld [vmem:[%s262 + $0x88] sm:$0xff]
        %v795 = vld [vmem:[%s262 + $0x90] sm:$0xff]
        %v796 = vld [vmem:[%s262 + $0x98] sm:$0xff]
        %v797 = vld [vmem:[%s262 + $0xa0] sm:$0xff]
        %v798 = vld [vmem:[%s262 + $0xa8] sm:$0xff]
        %v799 = vld [vmem:[%s262 + $0xb0] sm:$0xff]
        %v800 = vld [vmem:[%s262 + $0xb8] sm:$0xff]
        %v801 = vld [vmem:[%s262 + $0xc0] sm:$0xff]
        %v802 = vld [vmem:[%s262 + $0xc8] sm:$0xff]
        %v803 = vld [vmem:[%s262 + $0xd0] sm:$0xff]
        %v804 = vld [vmem:[%s262 + $0xd8] sm:$0xff]
        %v805 = vld [vmem:[%s262 + $0xe0] sm:$0xff]
        %v806 = vld [vmem:[%s262 + $0xe8] sm:$0xff]
        %v807 = vld [vmem:[%s262 + $0xf0] sm:$0xff]
        %v808 = vld [vmem:[%s262 + $0xf8] sm:$0xff]
        %v809 = vld [vmem:[%s262 + $0x100] sm:$0xff]
        %v810 = vmul.f32 %v777, 10.0
        %v811 = vmul.f32 %v778, 10.0
        %v812 = vmul.f32 %v779, 10.0
        %v813 = vmul.f32 %v780, 10.0
        %v814 = vmul.f32 %v781, 10.0
        %v815 = vmul.f32 %v782, 10.0
        %v816 = vmul.f32 %v783, 10.0
        %v817 = vmul.f32 %v784, 10.0
        %v818 = vmul.f32 %v785, 10.0
        %v819 = vmul.f32 %v786, 10.0
        %v820 = vmul.f32 %v787, 10.0
        %v821 = vmul.f32 %v788, 10.0
        %v822 = vmul.f32 %v789, 10.0
        %v823 = vmul.f32 %v790, 10.0
        %v824 = vmul.f32 %v791, 10.0
        %v825 = vmul.f32 %v792, 10.0
        %v826 = vmul.f32 %v793, 10.0
        %v827 = vmul.f32 %v794, 10.0
        %v828 = vmul.f32 %v795, 10.0
        %v829 = vmul.f32 %v796, 10.0
        %v830 = vmul.f32 %v797, 10.0
        %v831 = vmul.f32 %v798, 10.0
        %v832 = vmul.f32 %v799, 10.0
        %v833 = vmul.f32 %v800, 10.0
        %v834 = vmul.f32 %v801, 10.0
        %v835 = vmul.f32 %v802, 10.0
        %v836 = vmul.f32 %v803, 10.0
        %v837 = vmul.f32 %v804, 10.0
        %v838 = vmul.f32 %v805, 10.0
        %v839 = vmul.f32 %v806, 10.0
        %v840 = vmul.f32 %v807, 10.0
        %v841 = vmul.f32 %v808, 10.0
        %v842 = vmul.f32 %v809, 10.0
        %v843 = vmax.f32 %v810, %v814
        %v844 = vmax.f32 %v811, %v815
        %v845 = vmax.f32 %v812, %v816
        %v846 = vmax.f32 %v813, %v817
        %v847 = vmax.f32 %v843, %v818
        %v848 = vmax.f32 %v844, %v819
        %v849 = vmax.f32 %v845, %v820
        %v850 = vmax.f32 %v846, %v821
        %v851 = vmax.f32 %v847, %v822
        %v852 = vmax.f32 %v848, %v823
        %v853 = vmax.f32 %v849, %v824
        %v854 = vmax.f32 %v850, %v825
        %v855 = vmax.f32 %v851, %v826
        %v856 = vmax.f32 %v852, %v827
        %v857 = vmax.f32 %v853, %v828
        %v858 = vmax.f32 %v854, %v829
        %v859 = vmax.f32 %v855, %v830
        %v860 = vmax.f32 %v856, %v831
        %v861 = vmax.f32 %v857, %v832
        %v862 = vmax.f32 %v858, %v833
        %v863 = vmax.f32 %v859, %v834
        %v864 = vmax.f32 %v860, %v835
        %v865 = vmax.f32 %v861, %v836
        %v866 = vmax.f32 %v862, %v837
        %v867 = vmax.f32 %v863, %v838
        %v868 = vmax.f32 %v864, %v839
        %v869 = vmax.f32 %v865, %v840
        %v870 = vmax.f32 %v866, %v841
        %v871 = vmax.f32 %v867, %v842
        %v872 = vmax.f32 %v871, %v868
        %v873 = vmax.f32 %v869, %v870
        %v874 = vmax.f32 %v872, %v873
        %875 = vmax.xlane.f32.xlu0 %v874
        %v876 = vpop.xlane.xlu0 %875
        %v877 = vsub.f32 %v810, %v876
        %v878 = vsub.f32 %v811, %v876
        %v879 = vsub.f32 %v812, %v876
        %v880 = vsub.f32 %v813, %v876
        %v881 = vsub.f32 %v814, %v876
        %v882 = vsub.f32 %v815, %v876
        %v883 = vsub.f32 %v816, %v876
        %v884 = vsub.f32 %v817, %v876
        %v885 = vsub.f32 %v818, %v876
        %v886 = vsub.f32 %v819, %v876
        %v887 = vsub.f32 %v820, %v876
        %v888 = vsub.f32 %v821, %v876
        %v889 = vsub.f32 %v822, %v876
        %v890 = vsub.f32 %v823, %v876
        %v891 = vsub.f32 %v824, %v876
        %v892 = vsub.f32 %v825, %v876
        %v893 = vsub.f32 %v826, %v876
        %v894 = vsub.f32 %v827, %v876
        %v895 = vsub.f32 %v828, %v876
        %v896 = vsub.f32 %v829, %v876
        %v897 = vsub.f32 %v830, %v876
        %v898 = vsub.f32 %v831, %v876
        %v899 = vsub.f32 %v832, %v876
        %v900 = vsub.f32 %v833, %v876
        %v901 = vsub.f32 %v834, %v876
        %v902 = vsub.f32 %v835, %v876
        %v903 = vsub.f32 %v836, %v876
        %v904 = vsub.f32 %v837, %v876
        %v905 = vsub.f32 %v838, %v876
        %v906 = vsub.f32 %v839, %v876
        %v907 = vsub.f32 %v840, %v876
        %v908 = vsub.f32 %v841, %v876
        %v909 = vsub.f32 %v842, %v876
        %v910 = vmul.f32 %v877, 1.442695
        %v911 = vpow.pop %v910
        %v912 = vmul.f32 %v878, 1.442695
        %v913 = vpow.pop %v912
        %v914 = vmul.f32 %v879, 1.442695
        %v915 = vpow.pop %v914
        %v916 = vmul.f32 %v880, 1.442695
        %v917 = vpow.pop %v916
        %v918 = vmul.f32 %v881, 1.442695
        %v919 = vpow.pop %v918
        %v920 = vmul.f32 %v882, 1.442695
        %v921 = vpow.pop %v920
        %v922 = vmul.f32 %v883, 1.442695
        %v923 = vpow.pop %v922
        %v924 = vmul.f32 %v884, 1.442695
        %v925 = vpow.pop %v924
        %v926 = vmul.f32 %v885, 1.442695
        %v927 = vpow.pop %v926
        %v928 = vmul.f32 %v886, 1.442695
        %v929 = vpow.pop %v928
        %v930 = vmul.f32 %v887, 1.442695
        %v931 = vpow.pop %v930
        %v932 = vmul.f32 %v888, 1.442695
        %v933 = vpow.pop %v932
        %v934 = vmul.f32 %v889, 1.442695
        %v935 = vpow.pop %v934
        %v936 = vmul.f32 %v890, 1.442695
        %v937 = vpow.pop %v936
        %v938 = vmul.f32 %v891, 1.442695
        %v939 = vpow.pop %v938
        %v940 = vmul.f32 %v892, 1.442695
        %v941 = vpow.pop %v940
        %v942 = vmul.f32 %v893, 1.442695
        %v943 = vpow.pop %v942
        %v944 = vmul.f32 %v894, 1.442695
        %v945 = vpow.pop %v944
        %v946 = vmul.f32 %v895, 1.442695
        %v947 = vpow.pop %v946
        %v948 = vmul.f32 %v896, 1.442695
        %v949 = vpow.pop %v948
        %v950 = vmul.f32 %v897, 1.442695
        %v951 = vpow.pop %v950
        %v952 = vmul.f32 %v898, 1.442695
        %v953 = vpow.pop %v952
        %v954 = vmul.f32 %v899, 1.442695
        %v955 = vpow.pop %v954
        %v956 = vmul.f32 %v900, 1.442695
        %v957 = vpow.pop %v956
        %v958 = vmul.f32 %v901, 1.442695
        %v959 = vpow.pop %v958
        %v960 = vmul.f32 %v902, 1.442695
        %v961 = vpow.pop %v960
        %v962 = vmul.f32 %v903, 1.442695
        %v963 = vpow.pop %v962
        %v964 = vmul.f32 %v904, 1.442695
        %v965 = vpow.pop %v964
        %v966 = vmul.f32 %v905, 1.442695
        %v967 = vpow.pop %v966
        %v968 = vmul.f32 %v906, 1.442695
        %v969 = vpow.pop %v968
        %v970 = vmul.f32 %v907, 1.442695
        %v971 = vpow.pop %v970
        %v972 = vmul.f32 %v908, 1.442695
        %v973 = vpow.pop %v972
        %v974 = vmul.f32 %v909, 1.442695
        %v975 = vpow.pop %v974
        %v976 = vadd.f32 %v911, %v913
        %v977 = vadd.f32 %v976, %v915
        %v978 = vadd.f32 %v977, %v917
        %v979 = vadd.f32 %v978, %v919
        %v980 = vadd.f32 %v979, %v921
        %v981 = vadd.f32 %v980, %v923
        %v982 = vadd.f32 %v981, %v925
        %v983 = vadd.f32 %v982, %v927
        %v984 = vadd.f32 %v983, %v929
        %v985 = vadd.f32 %v984, %v931
        %v986 = vadd.f32 %v985, %v933
        %v987 = vadd.f32 %v986, %v935
        %v988 = vadd.f32 %v987, %v937
        %v989 = vadd.f32 %v988, %v939
        %v990 = vadd.f32 %v989, %v941
        %v991 = vadd.f32 %v990, %v943
        %v992 = vadd.f32 %v991, %v945
        %v993 = vadd.f32 %v992, %v947
        %v994 = vadd.f32 %v993, %v949
        %v995 = vadd.f32 %v994, %v951
        %v996 = vadd.f32 %v995, %v953
        %v997 = vadd.f32 %v996, %v955
        %v998 = vadd.f32 %v997, %v957
        %v999 = vadd.f32 %v998, %v959
        %v1000 = vadd.f32 %v999, %v961
        %v1001 = vadd.f32 %v1000, %v963
        %v1002 = vadd.f32 %v1001, %v965
        %v1003 = vadd.f32 %v1002, %v967
        %v1004 = vadd.f32 %v1003, %v969
        %v1005 = vadd.f32 %v1004, %v971
        %v1006 = vadd.f32 %v1005, %v973
        %v1007 = vadd.f32 %v1006, %v975
        %1008 = vadd.xlane.f32.xlu0 %v1007
        %v1009 = vpop.xlane.xlu0 %1008
        %v1010 = vlog2.pop %v1009
        %v1011 = vmul.f32 %v1010, 0.6931472
        %v1012 = vmul.f32 %v678, %v877
        %v1013 = vmul.f32 %v680, %v878
        %v1014 = vmul.f32 %v682, %v879
        %v1015 = vmul.f32 %v684, %v880
        %v1016 = vmul.f32 %v686, %v881
        %v1017 = vmul.f32 %v688, %v882
        %v1018 = vmul.f32 %v690, %v883
        %v1019 = vmul.f32 %v692, %v884
        %v1020 = vmul.f32 %v694, %v885
        %v1021 = vmul.f32 %v696, %v886
        %v1022 = vmul.f32 %v698, %v887
        %v1023 = vmul.f32 %v700, %v888
        %v1024 = vmul.f32 %v702, %v889
        %v1025 = vmul.f32 %v704, %v890
        %v1026 = vmul.f32 %v706, %v891
        %v1027 = vmul.f32 %v708, %v892
        %v1028 = vmul.f32 %v710, %v893
        %v1029 = vmul.f32 %v712, %v894
        %v1030 = vmul.f32 %v714, %v895
        %v1031 = vmul.f32 %v716, %v896
        %v1032 = vmul.f32 %v718, %v897
        %v1033 = vmul.f32 %v720, %v898
        %v1034 = vmul.f32 %v722, %v899
        %v1035 = vmul.f32 %v724, %v900
        %v1036 = vmul.f32 %v726, %v901
        %v1037 = vmul.f32 %v728, %v902
        %v1038 = vmul.f32 %v730, %v903
        %v1039 = vmul.f32 %v732, %v904
        %v1040 = vmul.f32 %v734, %v905
        %v1041 = vmul.f32 %v736, %v906
        %v1042 = vmul.f32 %v738, %v907
        %v1043 = vmul.f32 %v740, %v908
        %v1044 = vmul.f32 %v742, %v909
        %v1045 = vadd.f32 %v1012, %v1013
        %v1046 = vadd.f32 %v1045, %v1014
        %v1047 = vadd.f32 %v1046, %v1015
        %v1048 = vadd.f32 %v1047, %v1016
        %v1049 = vadd.f32 %v1048, %v1017
        %v1050 = vadd.f32 %v1049, %v1018
        %v1051 = vadd.f32 %v1050, %v1019
        %v1052 = vadd.f32 %v1051, %v1020
        %v1053 = vadd.f32 %v1052, %v1021
        %v1054 = vadd.f32 %v1053, %v1022
        %v1055 = vadd.f32 %v1054, %v1023
        %v1056 = vadd.f32 %v1055, %v1024
        %v1057 = vadd.f32 %v1056, %v1025
        %v1058 = vadd.f32 %v1057, %v1026
        %v1059 = vadd.f32 %v1058, %v1027
        %v1060 = vadd.f32 %v1059, %v1028
        %v1061 = vadd.f32 %v1060, %v1029
        %v1062 = vadd.f32 %v1061, %v1030
        %v1063 = vadd.f32 %v1062, %v1031
        %v1064 = vadd.f32 %v1063, %v1032
        %v1065 = vadd.f32 %v1064, %v1033
        %v1066 = vadd.f32 %v1065, %v1034
        %v1067 = vadd.f32 %v1066, %v1035
        %v1068 = vadd.f32 %v1067, %v1036
        %v1069 = vadd.f32 %v1068, %v1037
        %v1070 = vadd.f32 %v1069, %v1038
        %v1071 = vadd.f32 %v1070, %v1039
        %v1072 = vadd.f32 %v1071, %v1040
        %v1073 = vadd.f32 %v1072, %v1041
        %v1074 = vadd.f32 %v1073, %v1042
        %v1075 = vadd.f32 %v1074, %v1043
        %v1076 = vadd.f32 %v1075, %v1044
        %1077 = vadd.xlane.f32.xlu0 %v1076
        %v1078 = vpop.xlane.xlu0 %1077
        %v1079 = vrcp.pop %v776
        %v1080 = vmul.f32 %v1078, %v1079
        %v1081 = vsub.f32 %v1011, %v1080
        %s1082 = smul.u32 %s31, 2
        %s1083 = sadd.s32 %s1082, %s32
        %s1084 = smul.u32 %s1083, 8
        %v1085 = vlaneseq
        %v1086 = vshrl.u32 %v1085, 7
        %v1087 = vstv %s1084
        %v1088 = vadd.s32 %v1086, %v1087
        %vm1089 = vcmp.lt.s32.totalorder %v1088, 20
        %v1090 = vsel %vm1089, %v1081, 0.0
        %v1091 = vsel %vm1089, 1, 0
        %vm1092 = vcmp.eq.s32.totalorder %v1091, 1
        %v1093 = vsel %vm1092, %v335, 0.0
        %v1094 = vsel %vm1092, %v336, 0.0
        %v1095 = vsel %vm1092, %v337, 0.0
        %v1096 = vsel %vm1092, %v338, 0.0
        %v1097 = vsel %vm1092, %v339, 0.0
        %v1098 = vsel %vm1092, %v340, 0.0
        %v1099 = vsel %vm1092, %v341, 0.0
        %v1100 = vsel %vm1092, %v342, 0.0
        %v1101 = vsel %vm1092, %v343, 0.0
        %v1102 = vsel %vm1092, %v344, 0.0
        %v1103 = vsel %vm1092, %v345, 0.0
        %v1104 = vsel %vm1092, %v346, 0.0
        %v1105 = vsel %vm1092, %v347, 0.0
        %v1106 = vsel %vm1092, %v348, 0.0
        %v1107 = vsel %vm1092, %v349, 0.0
        %v1108 = vsel %vm1092, %v350, 0.0
        %v1109 = vsel %vm1092, %v351, 0.0
        %v1110 = vsel %vm1092, %v352, 0.0
        %v1111 = vsel %vm1092, %v353, 0.0
        %v1112 = vsel %vm1092, %v354, 0.0
        %v1113 = vsel %vm1092, %v355, 0.0
        %v1114 = vsel %vm1092, %v356, 0.0
        %v1115 = vsel %vm1092, %v357, 0.0
        %v1116 = vsel %vm1092, %v358, 0.0
        %v1117 = vsel %vm1092, %v359, 0.0
        %v1118 = vsel %vm1092, %v360, 0.0
        %v1119 = vsel %vm1092, %v361, 0.0
        %v1120 = vsel %vm1092, %v362, 0.0
        %v1121 = vsel %vm1092, %v363, 0.0
        %v1122 = vsel %vm1092, %v364, 0.0
        %v1123 = vsel %vm1092, %v365, 0.0
        %v1124 = vsel %vm1092, %v366, 0.0
        %v1125 = vsel %vm1092, %v367, 0.0
        %v1126 = vld [vmem:[%s318] sm:$0x1]
        %vm1127 = vcmask 7168
        %v1128 = vsel %vm1127, %v1090, 0.0
        %1129 = vadd.xlane.f32.xlu0 %v1128
        %v1130 = vpop.xlane.xlu0 %1129
        %v1131 = vrot.slane %v1130, 4
        %v1132 = vadd.f32 %v1130, %v1131
        %v1133 = vrot.slane %v1132, 2
        %v1134 = vadd.f32 %v1132, %v1133
        %v1135 = vrot.slane %v1134, 1
        %v1136 = vadd.f32 %v1134, %v1135
        %s1137 = vtos %v1136
        %v1138 = vstv %s1137
        %v1139 = vadd.f32 %v1126, %v1138
        %vm1140 = vcmask 0
        %1141 = vst.msk [vmem:[%s318] sm:$0x1] %vm1140, %v1139
        %v1142 = vld [vmem:[%s307] sm:$0xff]
        %v1143 = vld [vmem:[%s307 + $0x8] sm:$0xff]
        %v1144 = vld [vmem:[%s307 + $0x10] sm:$0xff]
        %v1145 = vld [vmem:[%s307 + $0x18] sm:$0xff]
        %v1146 = vld [vmem:[%s307 + $0x20] sm:$0x1]
        %v1147 = vrot.slane %v1093, 4
        %v1148 = vadd.f32 %v1093, %v1147
        %v1149 = vrot.slane %v1148, 2
        %v1150 = vadd.f32 %v1148, %v1149
        %v1151 = vrot.slane %v1150, 1
        %v1152 = vadd.f32 %v1150, %v1151
        %v1153 = vrot.slane %v1094, 4
        %v1154 = vadd.f32 %v1094, %v1153
        %v1155 = vrot.slane %v1154, 2
        %v1156 = vadd.f32 %v1154, %v1155
        %v1157 = vrot.slane %v1156, 1
        %v1158 = vadd.f32 %v1156, %v1157
        %v1159 = vrot.slane %v1095, 4
        %v1160 = vadd.f32 %v1095, %v1159
        %v1161 = vrot.slane %v1160, 2
        %v1162 = vadd.f32 %v1160, %v1161
        %v1163 = vrot.slane %v1162, 1
        %v1164 = vadd.f32 %v1162, %v1163
        %v1165 = vrot.slane %v1096, 4
        %v1166 = vadd.f32 %v1096, %v1165
        %v1167 = vrot.slane %v1166, 2
        %v1168 = vadd.f32 %v1166, %v1167
        %v1169 = vrot.slane %v1168, 1
        %v1170 = vadd.f32 %v1168, %v1169
        %v1171 = vrot.slane %v1097, 4
        %v1172 = vadd.f32 %v1097, %v1171
        %v1173 = vrot.slane %v1172, 2
        %v1174 = vadd.f32 %v1172, %v1173
        %v1175 = vrot.slane %v1174, 1
        %v1176 = vadd.f32 %v1174, %v1175
        %v1177 = vrot.slane %v1098, 4
        %v1178 = vadd.f32 %v1098, %v1177
        %v1179 = vrot.slane %v1178, 2
        %v1180 = vadd.f32 %v1178, %v1179
        %v1181 = vrot.slane %v1180, 1
        %v1182 = vadd.f32 %v1180, %v1181
        %v1183 = vrot.slane %v1099, 4
        %v1184 = vadd.f32 %v1099, %v1183
        %v1185 = vrot.slane %v1184, 2
        %v1186 = vadd.f32 %v1184, %v1185
        %v1187 = vrot.slane %v1186, 1
        %v1188 = vadd.f32 %v1186, %v1187
        %v1189 = vrot.slane %v1100, 4
        %v1190 = vadd.f32 %v1100, %v1189
        %v1191 = vrot.slane %v1190, 2
        %v1192 = vadd.f32 %v1190, %v1191
        %v1193 = vrot.slane %v1192, 1
        %v1194 = vadd.f32 %v1192, %v1193
        %v1195 = vrot.slane %v1101, 4
        %v1196 = vadd.f32 %v1101, %v1195
        %v1197 = vrot.slane %v1196, 2
        %v1198 = vadd.f32 %v1196, %v1197
        %v1199 = vrot.slane %v1198, 1
        %v1200 = vadd.f32 %v1198, %v1199
        %v1201 = vrot.slane %v1102, 4
        %v1202 = vadd.f32 %v1102, %v1201
        %v1203 = vrot.slane %v1202, 2
        %v1204 = vadd.f32 %v1202, %v1203
        %v1205 = vrot.slane %v1204, 1
        %v1206 = vadd.f32 %v1204, %v1205
        %v1207 = vrot.slane %v1103, 4
        %v1208 = vadd.f32 %v1103, %v1207
        %v1209 = vrot.slane %v1208, 2
        %v1210 = vadd.f32 %v1208, %v1209
        %v1211 = vrot.slane %v1210, 1
        %v1212 = vadd.f32 %v1210, %v1211
        %v1213 = vrot.slane %v1104, 4
        %v1214 = vadd.f32 %v1104, %v1213
        %v1215 = vrot.slane %v1214, 2
        %v1216 = vadd.f32 %v1214, %v1215
        %v1217 = vrot.slane %v1216, 1
        %v1218 = vadd.f32 %v1216, %v1217
        %v1219 = vrot.slane %v1105, 4
        %v1220 = vadd.f32 %v1105, %v1219
        %v1221 = vrot.slane %v1220, 2
        %v1222 = vadd.f32 %v1220, %v1221
        %v1223 = vrot.slane %v1222, 1
        %v1224 = vadd.f32 %v1222, %v1223
        %v1225 = vrot.slane %v1106, 4
        %v1226 = vadd.f32 %v1106, %v1225
        %v1227 = vrot.slane %v1226, 2
        %v1228 = vadd.f32 %v1226, %v1227
        %v1229 = vrot.slane %v1228, 1
        %v1230 = vadd.f32 %v1228, %v1229
        %v1231 = vrot.slane %v1107, 4
        %v1232 = vadd.f32 %v1107, %v1231
        %v1233 = vrot.slane %v1232, 2
        %v1234 = vadd.f32 %v1232, %v1233
        %v1235 = vrot.slane %v1234, 1
        %v1236 = vadd.f32 %v1234, %v1235
        %v1237 = vrot.slane %v1108, 4
        %v1238 = vadd.f32 %v1108, %v1237
        %v1239 = vrot.slane %v1238, 2
        %v1240 = vadd.f32 %v1238, %v1239
        %v1241 = vrot.slane %v1240, 1
        %v1242 = vadd.f32 %v1240, %v1241
        %v1243 = vrot.slane %v1109, 4
        %v1244 = vadd.f32 %v1109, %v1243
        %v1245 = vrot.slane %v1244, 2
        %v1246 = vadd.f32 %v1244, %v1245
        %v1247 = vrot.slane %v1246, 1
        %v1248 = vadd.f32 %v1246, %v1247
        %v1249 = vrot.slane %v1110, 4
        %v1250 = vadd.f32 %v1110, %v1249
        %v1251 = vrot.slane %v1250, 2
        %v1252 = vadd.f32 %v1250, %v1251
        %v1253 = vrot.slane %v1252, 1
        %v1254 = vadd.f32 %v1252, %v1253
        %v1255 = vrot.slane %v1111, 4
        %v1256 = vadd.f32 %v1111, %v1255
        %v1257 = vrot.slane %v1256, 2
        %v1258 = vadd.f32 %v1256, %v1257
        %v1259 = vrot.slane %v1258, 1
        %v1260 = vadd.f32 %v1258, %v1259
        %v1261 = vrot.slane %v1112, 4
        %v1262 = vadd.f32 %v1112, %v1261
        %v1263 = vrot.slane %v1262, 2
        %v1264 = vadd.f32 %v1262, %v1263
        %v1265 = vrot.slane %v1264, 1
        %v1266 = vadd.f32 %v1264, %v1265
        %v1267 = vrot.slane %v1113, 4
        %v1268 = vadd.f32 %v1113, %v1267
        %v1269 = vrot.slane %v1268, 2
        %v1270 = vadd.f32 %v1268, %v1269
        %v1271 = vrot.slane %v1270, 1
        %v1272 = vadd.f32 %v1270, %v1271
        %v1273 = vrot.slane %v1114, 4
        %v1274 = vadd.f32 %v1114, %v1273
        %v1275 = vrot.slane %v1274, 2
        %v1276 = vadd.f32 %v1274, %v1275
        %v1277 = vrot.slane %v1276, 1
        %v1278 = vadd.f32 %v1276, %v1277
        %v1279 = vrot.slane %v1115, 4
        %v1280 = vadd.f32 %v1115, %v1279
        %v1281 = vrot.slane %v1280, 2
        %v1282 = vadd.f32 %v1280, %v1281
        %v1283 = vrot.slane %v1282, 1
        %v1284 = vadd.f32 %v1282, %v1283
        %v1285 = vrot.slane %v1116, 4
        %v1286 = vadd.f32 %v1116, %v1285
        %v1287 = vrot.slane %v1286, 2
        %v1288 = vadd.f32 %v1286, %v1287
        %v1289 = vrot.slane %v1288, 1
        %v1290 = vadd.f32 %v1288, %v1289
        %v1291 = vrot.slane %v1117, 4
        %v1292 = vadd.f32 %v1117, %v1291
        %v1293 = vrot.slane %v1292, 2
        %v1294 = vadd.f32 %v1292, %v1293
        %v1295 = vrot.slane %v1294, 1
        %v1296 = vadd.f32 %v1294, %v1295
        %v1297 = vrot.slane %v1118, 4
        %v1298 = vadd.f32 %v1118, %v1297
        %v1299 = vrot.slane %v1298, 2
        %v1300 = vadd.f32 %v1298, %v1299
        %v1301 = vrot.slane %v1300, 1
        %v1302 = vadd.f32 %v1300, %v1301
        %v1303 = vrot.slane %v1119, 4
        %v1304 = vadd.f32 %v1119, %v1303
        %v1305 = vrot.slane %v1304, 2
        %v1306 = vadd.f32 %v1304, %v1305
        %v1307 = vrot.slane %v1306, 1
        %v1308 = vadd.f32 %v1306, %v1307
        %v1309 = vrot.slane %v1120, 4
        %v1310 = vadd.f32 %v1120, %v1309
        %v1311 = vrot.slane %v1310, 2
        %v1312 = vadd.f32 %v1310, %v1311
        %v1313 = vrot.slane %v1312, 1
        %v1314 = vadd.f32 %v1312, %v1313
        %v1315 = vrot.slane %v1121, 4
        %v1316 = vadd.f32 %v1121, %v1315
        %v1317 = vrot.slane %v1316, 2
        %v1318 = vadd.f32 %v1316, %v1317
        %v1319 = vrot.slane %v1318, 1
        %v1320 = vadd.f32 %v1318, %v1319
        %v1321 = vrot.slane %v1122, 4
        %v1322 = vadd.f32 %v1122, %v1321
        %v1323 = vrot.slane %v1322, 2
        %v1324 = vadd.f32 %v1322, %v1323
        %v1325 = vrot.slane %v1324, 1
        %v1326 = vadd.f32 %v1324, %v1325
        %v1327 = vrot.slane %v1123, 4
        %v1328 = vadd.f32 %v1123, %v1327
        %v1329 = vrot.slane %v1328, 2
        %v1330 = vadd.f32 %v1328, %v1329
        %v1331 = vrot.slane %v1330, 1
        %v1332 = vadd.f32 %v1330, %v1331
        %v1333 = vrot.slane %v1124, 4
        %v1334 = vadd.f32 %v1124, %v1333
        %v1335 = vrot.slane %v1334, 2
        %v1336 = vadd.f32 %v1334, %v1335
        %v1337 = vrot.slane %v1336, 1
        %v1338 = vadd.f32 %v1336, %v1337
        %v1339 = vrot.slane %v1125, 4
        %v1340 = vadd.f32 %v1125, %v1339
        %v1341 = vrot.slane %v1340, 2
        %v1342 = vadd.f32 %v1340, %v1341
        %v1343 = vrot.slane %v1342, 1
        %v1344 = vadd.f32 %v1342, %v1343
        %v1378 = vcombine.low %v1152, %v1158
        %v1379 = vcombine.low %v1164, %v1170
        %v1380 = vcombine.low %v1176, %v1182
        %v1381 = vcombine.low %v1188, %v1194
        %v1383 = vunpack.c.l.s4 1966171168
        %v1384 = vunpack.c.0.s8 %v1383
        %v1385 = vlaneseq
        %v1386 = vshrl.u32 %v1385, 7
        %v1387 = vsub.s32 %v1384, %v1386
        %v1388 = vrot.slane %v1378, %v1387
        %v1390 = vunpack.c.l.s4 1966171168
        %v1391 = vunpack.c.0.s8 %v1390
        %v1392 = vlaneseq
        %v1393 = vshrl.u32 %v1392, 7
        %v1394 = vsub.s32 %v1391, %v1393
        %v1395 = vrot.slane %v1379, %v1394
        %v1397 = vunpack.c.l.s4 1966171168
        %v1398 = vunpack.c.0.s8 %v1397
        %v1399 = vlaneseq
        %v1400 = vshrl.u32 %v1399, 7
        %v1401 = vsub.s32 %v1398, %v1400
        %v1402 = vrot.slane %v1380, %v1401
        %v1404 = vunpack.c.l.s4 1966171168
        %v1405 = vunpack.c.0.s8 %v1404
        %v1406 = vlaneseq
        %v1407 = vshrl.u32 %v1406, 7
        %v1408 = vsub.s32 %v1405, %v1407
        %v1409 = vrot.slane %v1381, %v1408
        %v1410 = vcombine.low %v1388, %v1395
        %v1411 = vcombine.low %v1402, %v1409
        %v1413 = vunpack.c.l.s4 1966171168
        %v1414 = vunpack.c.0.s8 %v1413
        %v1415 = vlaneseq
        %v1416 = vshrl.u32 %v1415, 7
        %v1417 = vsub.s32 %v1414, %v1416
        %v1418 = vrot.slane %v1410, %v1417
        %v1420 = vunpack.c.l.s4 1966171168
        %v1421 = vunpack.c.0.s8 %v1420
        %v1422 = vlaneseq
        %v1423 = vshrl.u32 %v1422, 7
        %v1424 = vsub.s32 %v1421, %v1423
        %v1425 = vrot.slane %v1411, %v1424
        %v1426 = vcombine.low %v1418, %v1425
        %v1427 = vcombine.low %v1200, %v1206
        %v1428 = vcombine.low %v1212, %v1218
        %v1429 = vcombine.low %v1224, %v1230
        %v1430 = vcombine.low %v1236, %v1242
        %v1432 = vunpack.c.l.s4 1966171168
        %v1433 = vunpack.c.0.s8 %v1432
        %v1434 = vlaneseq
        %v1435 = vshrl.u32 %v1434, 7
        %v1436 = vsub.s32 %v1433, %v1435
        %v1437 = vrot.slane %v1427, %v1436
        %v1439 = vunpack.c.l.s4 1966171168
        %v1440 = vunpack.c.0.s8 %v1439
        %v1441 = vlaneseq
        %v1442 = vshrl.u32 %v1441, 7
        %v1443 = vsub.s32 %v1440, %v1442
        %v1444 = vrot.slane %v1428, %v1443
        %v1446 = vunpack.c.l.s4 1966171168
        %v1447 = vunpack.c.0.s8 %v1446
        %v1448 = vlaneseq
        %v1449 = vshrl.u32 %v1448, 7
        %v1450 = vsub.s32 %v1447, %v1449
        %v1451 = vrot.slane %v1429, %v1450
        %v1453 = vunpack.c.l.s4 1966171168
        %v1454 = vunpack.c.0.s8 %v1453
        %v1455 = vlaneseq
        %v1456 = vshrl.u32 %v1455, 7
        %v1457 = vsub.s32 %v1454, %v1456
        %v1458 = vrot.slane %v1430, %v1457
        %v1459 = vcombine.low %v1437, %v1444
        %v1460 = vcombine.low %v1451, %v1458
        %v1462 = vunpack.c.l.s4 1966171168
        %v1463 = vunpack.c.0.s8 %v1462
        %v1464 = vlaneseq
        %v1465 = vshrl.u32 %v1464, 7
        %v1466 = vsub.s32 %v1463, %v1465
        %v1467 = vrot.slane %v1459, %v1466
        %v1469 = vunpack.c.l.s4 1966171168
        %v1470 = vunpack.c.0.s8 %v1469
        %v1471 = vlaneseq
        %v1472 = vshrl.u32 %v1471, 7
        %v1473 = vsub.s32 %v1470, %v1472
        %v1474 = vrot.slane %v1460, %v1473
        %v1475 = vcombine.low %v1467, %v1474
        %v1476 = vcombine.low %v1248, %v1254
        %v1477 = vcombine.low %v1260, %v1266
        %v1478 = vcombine.low %v1272, %v1278
        %v1479 = vcombine.low %v1284, %v1290
        %v1481 = vunpack.c.l.s4 1966171168
        %v1482 = vunpack.c.0.s8 %v1481
        %v1483 = vlaneseq
        %v1484 = vshrl.u32 %v1483, 7
        %v1485 = vsub.s32 %v1482, %v1484
        %v1486 = vrot.slane %v1476, %v1485
        %v1488 = vunpack.c.l.s4 1966171168
        %v1489 = vunpack.c.0.s8 %v1488
        %v1490 = vlaneseq
        %v1491 = vshrl.u32 %v1490, 7
        %v1492 = vsub.s32 %v1489, %v1491
        %v1493 = vrot.slane %v1477, %v1492
        %v1495 = vunpack.c.l.s4 1966171168
        %v1496 = vunpack.c.0.s8 %v1495
        %v1497 = vlaneseq
        %v1498 = vshrl.u32 %v1497, 7
        %v1499 = vsub.s32 %v1496, %v1498
        %v1500 = vrot.slane %v1478, %v1499
        %v1502 = vunpack.c.l.s4 1966171168
        %v1503 = vunpack.c.0.s8 %v1502
        %v1504 = vlaneseq
        %v1505 = vshrl.u32 %v1504, 7
        %v1506 = vsub.s32 %v1503, %v1505
        %v1507 = vrot.slane %v1479, %v1506
        %v1508 = vcombine.low %v1486, %v1493
        %v1509 = vcombine.low %v1500, %v1507
        %v1511 = vunpack.c.l.s4 1966171168
        %v1512 = vunpack.c.0.s8 %v1511
        %v1513 = vlaneseq
        %v1514 = vshrl.u32 %v1513, 7
        %v1515 = vsub.s32 %v1512, %v1514
        %v1516 = vrot.slane %v1508, %v1515
        %v1518 = vunpack.c.l.s4 1966171168
        %v1519 = vunpack.c.0.s8 %v1518
        %v1520 = vlaneseq
        %v1521 = vshrl.u32 %v1520, 7
        %v1522 = vsub.s32 %v1519, %v1521
        %v1523 = vrot.slane %v1509, %v1522
        %v1524 = vcombine.low %v1516, %v1523
        %v1525 = vcombine.low %v1296, %v1302
        %v1526 = vcombine.low %v1308, %v1314
        %v1527 = vcombine.low %v1320, %v1326
        %v1528 = vcombine.low %v1332, %v1338
        %v1530 = vunpack.c.l.s4 1966171168
        %v1531 = vunpack.c.0.s8 %v1530
        %v1532 = vlaneseq
        %v1533 = vshrl.u32 %v1532, 7
        %v1534 = vsub.s32 %v1531, %v1533
        %v1535 = vrot.slane %v1525, %v1534
        %v1537 = vunpack.c.l.s4 1966171168
        %v1538 = vunpack.c.0.s8 %v1537
        %v1539 = vlaneseq
        %v1540 = vshrl.u32 %v1539, 7
        %v1541 = vsub.s32 %v1538, %v1540
        %v1542 = vrot.slane %v1526, %v1541
        %v1544 = vunpack.c.l.s4 1966171168
        %v1545 = vunpack.c.0.s8 %v1544
        %v1546 = vlaneseq
        %v1547 = vshrl.u32 %v1546, 7
        %v1548 = vsub.s32 %v1545, %v1547
        %v1549 = vrot.slane %v1527, %v1548
        %v1551 = vunpack.c.l.s4 1966171168
        %v1552 = vunpack.c.0.s8 %v1551
        %v1553 = vlaneseq
        %v1554 = vshrl.u32 %v1553, 7
        %v1555 = vsub.s32 %v1552, %v1554
        %v1556 = vrot.slane %v1528, %v1555
        %v1557 = vcombine.low %v1535, %v1542
        %v1558 = vcombine.low %v1549, %v1556
        %v1560 = vunpack.c.l.s4 1966171168
        %v1561 = vunpack.c.0.s8 %v1560
        %v1562 = vlaneseq
        %v1563 = vshrl.u32 %v1562, 7
        %v1564 = vsub.s32 %v1561, %v1563
        %v1565 = vrot.slane %v1557, %v1564
        %v1567 = vunpack.c.l.s4 1966171168
        %v1568 = vunpack.c.0.s8 %v1567
        %v1569 = vlaneseq
        %v1570 = vshrl.u32 %v1569, 7
        %v1571 = vsub.s32 %v1568, %v1570
        %v1572 = vrot.slane %v1558, %v1571
        %v1573 = vcombine.low %v1565, %v1572
        %v1575 = vunpack.c.l.s4 1966171168
        %v1576 = vunpack.c.0.s8 %v1575
        %v1577 = vlaneseq
        %v1578 = vshrl.u32 %v1577, 7
        %v1579 = vsub.s32 %v1576, %v1578
        %v1580 = vrot.slane %v1344, %v1579
        %v1582 = vunpack.c.l.s4 1966171168
        %v1583 = vunpack.c.0.s8 %v1582
        %v1584 = vlaneseq
        %v1585 = vshrl.u32 %v1584, 7
        %v1586 = vsub.s32 %v1583, %v1585
        %v1587 = vrot.slane %v1580, %v1586
        %v1593 = vadd.f32 %v1142, %v1426
        %v1594 = vadd.f32 %v1143, %v1475
        %v1595 = vadd.f32 %v1144, %v1524
        %v1596 = vadd.f32 %v1145, %v1573
        %v1597 = vadd.f32 %v1146, %v1587
        %1598 = vst [vmem:[%s307] sm:$0xff] %v1593
        %1599 = vst [vmem:[%s307 + $0x8] sm:$0xff] %v1594
        %1600 = vst [vmem:[%s307 + $0x10] sm:$0xff] %v1595
        %1601 = vst [vmem:[%s307 + $0x18] sm:$0xff] %v1596
        %v1602 = vlaneseq
        %vm1603 = vcmp.ge.s32.totalorder %v1602, 0
        %vm1604 = vcmp.lt.s32.totalorder %v1602, 128
        %vm1605 = vmand %vm1603, %vm1604
        %1606 = vst.msk [vmem:[%s307 + $0x20] sm:$0x1] %vm1605, %v1597
        %p1607 = scmp.lt.s32.totalorder %s31, 1
        %s1608 = scalar_select %p1607, %s31, 1
        %s1609 = scalar_lea.vmem %s4, %s1608
        %s1610 = sand.u32 %s162, 1
        %s1611 = scalar_lea.sflag [#allocation6], %s1610
        %s1612 = sand.u32 %s162, 1
        %s1613 = smul.addr %s1612, 33
        %s1614 = scalar_lea.vmem [#allocation10], %s1613
        // Predicated region
        $region49: #{tpu_custom_call.1} parent=31 // pred_check
          %p1615 = pneg %p146
        $region50: #{tpu_custom_call.1} parent=31 // pred_check_branch
          %1617 = sbr.rel (%p1615) target = $region52
        $region51: #{tpu_custom_call.1} parent=31 // pred_region
          _
        $region52: #{tpu_custom_call.1} parent=31 // pred_fallthru
          _
        // Predicated region
        $region53: #{tpu_custom_call.1} parent=31 // pred_check
          %p1618 = pneg %p172
        $region54: #{tpu_custom_call.1} parent=31 // pred_check_branch
          %1620 = sbr.rel (%p1618) target = $region56
        $region55: #{tpu_custom_call.1} parent=31 // pred_region
          %s1622 = ssub.s32 528, 528
          %1623 = vsyncadd %s1611, %s1622
          %s1624 = smul.addr %s31, 33
          %s1625 = smul.addr %s1624, 16
          %s1626 = scalar_lea.hbm %s5, %s1625
          %s1628 = sshll.u32 %s1614, 4
          %s1629 = int_to_ptr.vmem [resolvable:$true] %s1628
          %1631 = dma.vmem_to_hbm [thread:$0]  %s1629, 528, %s1626, %s1611
        $region56: #{tpu_custom_call.1} parent=31 // pred_fallthru
          _
      $region32: #{tpu_custom_call.1} parent=5 // pred_fallthru
        _
      %p1632 = scmp.le.s32.totalorder 2, %s22
      // Predicated region
      $region57: #{tpu_custom_call.1} parent=5 // pred_check
        %p1633 = pneg %p1632
      $region58: #{tpu_custom_call.1} parent=5 // pred_check_branch
        %1635 = sbr.rel (%p1633) target = $region60
      $region59: #{tpu_custom_call.1} parent=5 // pred_region
        %s1636 = ssub.s32 %s22, 2
        // Predicated region
        $region61: #{tpu_custom_call.1} parent=59 // pred_check
          %p1637 = pneg %p152
        $region62: #{tpu_custom_call.1} parent=59 // pred_check_branch
          %1639 = sbr.rel (%p1637) target = $region64
        $region63: #{tpu_custom_call.1} parent=59 // pred_region
          %p1640 = scmp.lt.s32.totalorder %s33, 1
          %s1641 = scalar_select %p1640, %s33, 1
          %s1642 = scalar_lea.vmem %s4, %s1641
        $region64: #{tpu_custom_call.1} parent=59 // pred_fallthru
          _
        // Predicated region
        $region65: #{tpu_custom_call.1} parent=59 // pred_check
          %p1643 = pneg %p178
        $region66: #{tpu_custom_call.1} parent=59 // pred_check_branch
          %1645 = sbr.rel (%p1643) target = $region68
        $region67: #{tpu_custom_call.1} parent=59 // pred_region
          %s1646 = sand.u32 %s163, 1
          %s1647 = scalar_lea.sflag [#allocation6], %s1646
          %s1648 = sand.u32 %s163, 1
          %s1649 = smul.addr %s1648, 33
          %s1650 = scalar_lea.vmem [#allocation10], %s1649
          %1651 = dma.done %s1647, 528
        $region68: #{tpu_custom_call.1} parent=59 // pred_fallthru
          _
      $region60: #{tpu_custom_call.1} parent=5 // pred_fallthru
        _
    $region6: #{tpu_custom_call.1} parent=1 // loop_footer
      %s26 = sadd.s32 1, %s22
    $region7: #{tpu_custom_call.1} parent=1 // loop_footer_branch
      %21 = sbr.rel target = $region3
    $region8: #{tpu_custom_call.1} parent=1 // loop_exit
      _
    %1652 = vsyncpa [#allocation5], 1
    %s1653 = scalar_lea.sflag [#allocation5], 1
    %1654 = vsyncpa %s1653, 1
    %1655 = vsyncpa [#allocation8], 1
    %s1656 = scalar_lea.sflag [#allocation8], 1
    %1657 = vsyncpa %s1656, 1
    %1658 = vsyncpa [#allocation6], 1
    %s1659 = scalar_lea.sflag [#allocation6], 1
    %1660 = vsyncpa %s1659, 1

</llo_original>
